<compile_context>
chip_gen: v6e
topology: v6e:2x2x1
jax: 0.10.0
libtpu: 0.0.40
codegen_flags: <defaults>
</compile_context>

<pallas_src>
import jax
import jax.numpy as jnp
from jax.experimental import pallas as pl
from jax.experimental.pallas import tpu as pltpu


def gru_decode_kernel(x_ref, y0_ref, h0_ref,
                      wih_ref, whh_ref, bi_ref, bhn_ref, wl_ref, bl_ref,
                      out_ref):
    """Single invocation: runs the whole autoregressive GRU decode internally."""
    B, T, _ = x_ref.shape
    HP = whh_ref.shape[0]        # hidden size padded to a multiple of 128 (per-gate lane tile)
    O = bl_ref.shape[1]

    # ---- load once; weights/biases stay resident for the whole recurrence ----
    x_all = x_ref[...]                                     # (B, T, I)   f32
    wih = wih_ref[...]                                     # (I+O, 3*HP) bf16
    whh = whh_ref[...]                                     # (HP, 3*HP)  bf16
    # Broadcasts hoisted out of the time loop (broadcast_in_dim is not CSE'd by JAX).
    b_i = jnp.broadcast_to(bi_ref[...], (B, 3 * HP))       # b_ih (+ b_hh for r,z gates)
    b_hn = jnp.broadcast_to(bhn_ref[...], (B, HP))         # b_hh, n gate only
    b_l = jnp.broadcast_to(bl_ref[...], (B, O))

    head_is_vpu = (wl_ref.shape == (1, HP))                # output_size == 1 specialization
    if head_is_vpu:
        wl = jnp.broadcast_to(wl_ref[...], (B, HP))        # f32 row vector
    else:
        wl = wl_ref[...]                                   # (HP, O) bf16

    h = h0_ref[...]                                        # (B, HP) f32 hidden state
    y_last = y0_ref[...]                                   # (B, O)  f32 autoregressive feedback

    ys = []
    # Static unroll over the horizon (T is small): equivalent to fori_loop(..., unroll=True)
    # and gives the scheduler full cross-timestep visibility.
    for t in range(T):
        # Fused input projection: concat(x_t, y_last) @ W_ih  (bf16 operands, f32 accumulation)
        xy = jnp.concatenate([x_all[:, t, :], y_last], axis=-1)          # (B, I+O)
        gi = jnp.dot(xy.astype(jnp.bfloat16), wih,
                     preferred_element_type=jnp.float32) + b_i            # (B, 3*HP)
        gh = jnp.dot(h.astype(jnp.bfloat16), whh,
                     preferred_element_type=jnp.float32)                  # (B, 3*HP)

        # Gate slices are lane-tile aligned (each gate owns its own 128-lane block).
        r = jax.nn.sigmoid(gi[:, 0:HP] + gh[:, 0:HP])
        z = jax.nn.sigmoid(gi[:, HP:2 * HP] + gh[:, HP:2 * HP])
        n = jnp.tanh(gi[:, 2 * HP:] + r * (gh[:, 2 * HP:] + b_hn))
        h = (1.0 - z) * n + z * h                                         # f32 gate math

        # Output head.
        if head_is_vpu:
            # O == 1: VPU multiply + lane reduction; keeps the serial path off the MXU.
            y_last = jnp.sum(h * wl, axis=-1, keepdims=True) + b_l
        else:
            y_last = jnp.dot(h.astype(jnp.bfloat16), wl,
                             preferred_element_type=jnp.float32) + b_l
        ys.append(y_last)

    # Single dense store of the whole output slab (B, T*O); HBM writeback happens once.
    out_ref[...] = jnp.concatenate(ys, axis=-1).astype(out_ref.dtype)


def lstm_decode_pallas(x_fut, y_past, ht, packed, output_size):
    """Wrapper: one pallas_call, whole arrays resident in VMEM, no host-side transposes."""
    B, T, I = x_fut.shape
    H = ht.shape[1]
    HP = packed["hp"]                     # static python int (multiple of 128)
    O = output_size

    h0 = jnp.zeros((B, HP), jnp.float32).at[:, :H].set(ht)   # zero-padded hidden state (exact)
    y0 = y_past[:, -1, :]                                     # (B, O)

    grid_spec = pltpu.PrefetchScalarGridSpec(
        num_scalar_prefetch=0,
        grid=(1,),                                  # whole recurrence in a single grid step
        in_specs=[
            pl.BlockSpec((B, T, I), lambda i: (0, 0, 0)),          # x_fut (batch-major, as-is)
            pl.BlockSpec((B, O), lambda i: (0, 0)),                 # y_last init
            pl.BlockSpec((B, HP), lambda i: (0, 0)),                # h init (padded)
            pl.BlockSpec((I + O, 3 * HP), lambda i: (0, 0)),        # fused W_ih (bf16)
            pl.BlockSpec((HP, 3 * HP), lambda i: (0, 0)),           # W_hh (bf16)
            pl.BlockSpec((1, 3 * HP), lambda i: (0, 0)),            # b_ih (+ b_hh r,z)
            pl.BlockSpec((1, HP), lambda i: (0, 0)),                # b_hh n gate
            pl.BlockSpec(tuple(packed["wl"].shape), lambda i: (0, 0)),  # linear head weight
            pl.BlockSpec((1, O), lambda i: (0, 0)),                 # linear head bias
        ],
        out_specs=pl.BlockSpec((B, T * O), lambda i: (0, 0)),
    )

    out_flat = pl.pallas_call(
        gru_decode_kernel,
        out_shape=jax.ShapeDtypeStruct((B, T * O), jnp.float32),
        grid_spec=grid_spec,
        compiler_params=pltpu.CompilerParams(
            dimension_semantics=("arbitrary",)),    # sequential recurrence; tiny VMEM footprint
    )(x_fut, y0, h0, packed["wih"], packed["whh"], packed["b_i"],
      packed["b_hn"], packed["wl"], packed["b_l"])

    return out_flat.reshape(B, T, O)


def init_params(key, input_size, hidden_size, output_size):
    """Raw PyTorch-layout GRUCell/Linear params, uniform(-1/sqrt(H), 1/sqrt(H))."""
    I, H, O = input_size, hidden_size, output_size
    k = 1.0 / (H ** 0.5)
    keys = jax.random.split(key, 6)
    return {
        "w_ih": jax.random.uniform(keys[0], (3 * H, I + O), jnp.float32, -k, k),
        "w_hh": jax.random.uniform(keys[1], (3 * H, H), jnp.float32, -k, k),
        "b_ih": jax.random.uniform(keys[2], (3 * H,), jnp.float32, -k, k),
        "b_hh": jax.random.uniform(keys[3], (3 * H,), jnp.float32, -k, k),
        "w_lin": jax.random.uniform(keys[4], (O, H), jnp.float32, -k, k),
        "b_lin": jax.random.uniform(keys[5], (O,), jnp.float32, -k, k),
    }


def pack_params(params, input_size, hidden_size, output_size):
    """Repack raw params into the kernel layout.

    Each gate's weight columns are zero-padded to a 128-lane tile (exact: padded hidden
    units provably stay zero through the recurrence). Weights are bf16 (MXU-native);
    biases and the O==1 head weight stay f32 (VPU math).
    """
    I, H, O = input_size, hidden_size, output_size
    HP = ((H + 127) // 128) * 128

    w_ih, w_hh = params["w_ih"], params["w_hh"]
    b_ih, b_hh = params["b_ih"], params["b_hh"]

    wih_p = jnp.zeros((I + O, 3 * HP), jnp.float32)
    whh_p = jnp.zeros((HP, 3 * HP), jnp.float32)
    for g in range(3):  # gate order: r, z, n
        wih_p = wih_p.at[:, g * HP:g * HP + H].set(w_ih[g * H:(g + 1) * H, :].T)
        whh_p = whh_p.at[0:H, g * HP:g * HP + H].set(w_hh[g * H:(g + 1) * H, :].T)

    # Pre-add b_hh into b_ih for the r,z gates; keep b_hh(n) separate (lives inside r * h_n).
    b_i = jnp.zeros((1, 3 * HP), jnp.float32)
    b_i = b_i.at[0, 0 * HP:0 * HP + H].set(b_ih[0:H] + b_hh[0:H])
    b_i = b_i.at[0, 1 * HP:1 * HP + H].set(b_ih[H:2 * H] + b_hh[H:2 * H])
    b_i = b_i.at[0, 2 * HP:2 * HP + H].set(b_ih[2 * H:3 * H])
    b_hn = jnp.zeros((1, HP), jnp.float32).at[0, 0:H].set(b_hh[2 * H:3 * H])

    if O == 1:
        wl = jnp.zeros((1, HP), jnp.float32).at[0, 0:H].set(params["w_lin"][0])     # f32 row
    else:
        wl = (jnp.zeros((HP, O), jnp.float32)
              .at[0:H, :].set(params["w_lin"].T)).astype(jnp.bfloat16)

    return {
        "wih": wih_p.astype(jnp.bfloat16),
        "whh": whh_p.astype(jnp.bfloat16),
        "b_i": b_i,
        "b_hn": b_hn,
        "wl": wl,
        "b_l": params["b_lin"].reshape(1, O),
        "hp": HP,
    }


def gru_decode_ref(x_fut, y_past, ht, params):
    """Pure-JAX reference: exact PyTorch GRUCell/Linear math (gate order r,z,n,
    autoregressive feedback, teacher_forcing_prob=0.0), mirroring the kernel's numerics
    (bf16 matmul operands, f32 accumulation, f32 gate math). Removing the bfloat16 casts
    gives the strict f32 PyTorch forward."""
    B, T, I = x_fut.shape
    H = ht.shape[1]
    O = params["w_lin"].shape[0]
    w_ih_t = params["w_ih"].T.astype(jnp.bfloat16)   # (I+O, 3H)
    w_hh_t = params["w_hh"].T.astype(jnp.bfloat16)   # (H, 3H)
    b_ih, b_hh = params["b_ih"], params["b_hh"]
    b_lin = params["b_lin"].reshape(1, O)

    h = ht
    y_last = y_past[:, -1, :]
    outs = []
    for t in range(T):
        xy = jnp.concatenate([x_fut[:, t, :], y_last], axis=-1).astype(jnp.bfloat16)
        gi = jnp.dot(xy, w_ih_t, preferred_element_type=jnp.float32) + b_ih
        gh = jnp.dot(h.astype(jnp.bfloat16), w_hh_t, preferred_element_type=jnp.float32) + b_hh
        r = jax.nn.sigmoid(gi[:, :H] + gh[:, :H])
        z = jax.nn.sigmoid(gi[:, H:2 * H] + gh[:, H:2 * H])
        n = jnp.tanh(gi[:, 2 * H:] + r * gh[:, 2 * H:])
        h = (1.0 - z) * n + z * h
        if O == 1:
            y = jnp.sum(h * params["w_lin"][0][None, :], axis=-1, keepdims=True) + b_lin
        else:
            y = jnp.dot(h.astype(jnp.bfloat16), params["w_lin"].T.astype(jnp.bfloat16),
                        preferred_element_type=jnp.float32) + b_lin
        outs.append(y)
        y_last = y
    return jnp.stack(outs, axis=1)


if __name__ == "__main__":
    B, T, T_PAST = 2, 8, 6
    INPUT_SIZE, HIDDEN, OUTPUT = 4, 32, 1

    key = jax.random.PRNGKey(0)
    k_x, k_y, k_h, k_p = jax.random.split(key, 4)
    x_fut = jax.random.normal(k_x, (B, T, INPUT_SIZE), jnp.float32)
    y_past = jax.random.normal(k_y, (B, T_PAST, OUTPUT), jnp.float32)
    ht = jax.random.normal(k_h, (B, HIDDEN), jnp.float32)

    params = init_params(k_p, INPUT_SIZE, HIDDEN, OUTPUT)
    packed = pack_params(params, INPUT_SIZE, HIDDEN, OUTPUT)

    out = lstm_decode_pallas(x_fut, y_past, ht, packed, OUTPUT)
    out = jax.block_until_ready(out)

    ref = gru_decode_ref(x_fut, y_past, ht, params)
    assert out.shape == (B, T, OUTPUT)
    assert jnp.allclose(out, ref, atol=2e-3, rtol=2e-3), \
        f"mismatch vs JAX reference: max abs diff {jnp.max(jnp.abs(out - ref))}"

    # TODO(synk): teacher forcing with np.random draws (y_fut_teacher path) is not modeled;
    # the module sets teacher_forcing_prob = 0.0 so that branch is never taken in forward.
    print("KERNEL_OK")
</pallas_src>

<mosaic_0001>
module attributes {stable_mosaic.version = 11 : i64} {
  func.func @gru_decode_kernel(%arg0: i32, %arg1: memref<2x8x4xf32, #tpu.memory_space<vmem>>, %arg2: memref<2x1xf32, #tpu.memory_space<vmem>>, %arg3: memref<2x128xf32, #tpu.memory_space<vmem>>, %arg4: memref<5x384xbf16, #tpu.memory_space<vmem>>, %arg5: memref<128x384xbf16, #tpu.memory_space<vmem>>, %arg6: memref<1x384xf32, #tpu.memory_space<vmem>>, %arg7: memref<1x128xf32, #tpu.memory_space<vmem>>, %arg8: memref<1x128xf32, #tpu.memory_space<vmem>>, %arg9: memref<1x1xf32, #tpu.memory_space<vmem>>, %arg10: memref<2x8xf32, #tpu.memory_space<vmem>>) attributes {dimension_semantics = [#tpu.dimension_semantics<arbitrary>], iteration_bounds = array<i64: 1>, scalar_prefetch = 0 : i64, scratch_operands = 0 : i64, tpu.core_type = #tpu.core_type<tc>, window_params = [{pipeline_mode = #tpu.pipeline_mode<synchronous>, transform_indices = @transform_0, window_bounds = array<i64: 2, 8, 4>}, {pipeline_mode = #tpu.pipeline_mode<synchronous>, transform_indices = @transform_1, window_bounds = array<i64: 2, 1>}, {pipeline_mode = #tpu.pipeline_mode<synchronous>, transform_indices = @transform_2, window_bounds = array<i64: 2, 128>}, {pipeline_mode = #tpu.pipeline_mode<synchronous>, transform_indices = @transform_3, window_bounds = array<i64: 5, 384>}, {pipeline_mode = #tpu.pipeline_mode<synchronous>, transform_indices = @transform_4, window_bounds = array<i64: 128, 384>}, {pipeline_mode = #tpu.pipeline_mode<synchronous>, transform_indices = @transform_5, window_bounds = array<i64: 1, 384>}, {pipeline_mode = #tpu.pipeline_mode<synchronous>, transform_indices = @transform_6, window_bounds = array<i64: 1, 128>}, {pipeline_mode = #tpu.pipeline_mode<synchronous>, transform_indices = @transform_7, window_bounds = array<i64: 1, 128>}, {pipeline_mode = #tpu.pipeline_mode<synchronous>, transform_indices = @transform_8, window_bounds = array<i64: 1, 1>}, {pipeline_mode = #tpu.pipeline_mode<synchronous>, transform_indices = @transform_9, window_bounds = array<i64: 2, 8>}]} {
    %c0 = arith.constant 0 : index
    %c0_0 = arith.constant 0 : index
    %c0_1 = arith.constant 0 : index
    %0 = vector.load %arg1[%c0, %c0_0, %c0_1] : memref<2x8x4xf32, #tpu.memory_space<vmem>>, vector<2x8x4xf32>
    %c0_2 = arith.constant 0 : index
    %c0_3 = arith.constant 0 : index
    %1 = vector.load %arg4[%c0_2, %c0_3] : memref<5x384xbf16, #tpu.memory_space<vmem>>, vector<5x384xbf16>
    %c0_4 = arith.constant 0 : index
    %c0_5 = arith.constant 0 : index
    %2 = vector.load %arg5[%c0_4, %c0_5] : memref<128x384xbf16, #tpu.memory_space<vmem>>, vector<128x384xbf16>
    %c0_6 = arith.constant 0 : index
    %c0_7 = arith.constant 0 : index
    %3 = vector.load %arg6[%c0_6, %c0_7] : memref<1x384xf32, #tpu.memory_space<vmem>>, vector<1x384xf32>
    %4 = vector.shape_cast %3 : vector<1x384xf32> to vector<1x384xf32>
    %5 = vector.broadcast %4 : vector<1x384xf32> to vector<2x384xf32>
    %c0_8 = arith.constant 0 : index
    %c0_9 = arith.constant 0 : index
    %6 = vector.load %arg7[%c0_8, %c0_9] : memref<1x128xf32, #tpu.memory_space<vmem>>, vector<1x128xf32>
    %7 = vector.shape_cast %6 : vector<1x128xf32> to vector<1x128xf32>
    %8 = vector.broadcast %7 : vector<1x128xf32> to vector<2x128xf32>
    %c0_10 = arith.constant 0 : index
    %c0_11 = arith.constant 0 : index
    %9 = vector.load %arg9[%c0_10, %c0_11] : memref<1x1xf32, #tpu.memory_space<vmem>>, vector<1x1xf32>
    %10 = vector.shape_cast %9 : vector<1x1xf32> to vector<1x1xf32>
    %11 = vector.broadcast %10 : vector<1x1xf32> to vector<2x1xf32>
    %c0_12 = arith.constant 0 : index
    %c0_13 = arith.constant 0 : index
    %12 = vector.load %arg8[%c0_12, %c0_13] : memref<1x128xf32, #tpu.memory_space<vmem>>, vector<1x128xf32>
    %13 = vector.shape_cast %12 : vector<1x128xf32> to vector<1x128xf32>
    %14 = vector.broadcast %13 : vector<1x128xf32> to vector<2x128xf32>
    %c0_14 = arith.constant 0 : index
    %c0_15 = arith.constant 0 : index
    %15 = vector.load %arg3[%c0_14, %c0_15] : memref<2x128xf32, #tpu.memory_space<vmem>>, vector<2x128xf32>
    %c0_16 = arith.constant 0 : index
    %c0_17 = arith.constant 0 : index
    %16 = vector.load %arg2[%c0_16, %c0_17] : memref<2x1xf32, #tpu.memory_space<vmem>>, vector<2x1xf32>
    %17 = vector.extract_strided_slice %0 {offsets = [0, 0, 0], sizes = [2, 1, 4], strides = [1, 1, 1]} : vector<2x8x4xf32> to vector<2x1x4xf32>
    %18 = vector.shape_cast %17 : vector<2x1x4xf32> to vector<2x4xf32>
    %19 = tpu.concatenate %18, %16 in 1 : vector<2x4xf32>, vector<2x1xf32> -> vector<2x5xf32>
    %20 = arith.truncf %19 : vector<2x5xf32> to vector<2x5xbf16>
    %cst = arith.constant dense<0.000000e+00> : vector<2x384xf32>
    %21 = tpu.matmul %20, %1, %cst {dimension_numbers = #tpu.dot_dimension_numbers<[1], [0], [0], [1], [0, 0, 1, 1], [], []>} : vector<2x5xbf16>, vector<5x384xbf16>, vector<2x384xf32> -> vector<2x384xf32>
    %22 = arith.addf %21, %5 : vector<2x384xf32>
    %23 = arith.truncf %15 : vector<2x128xf32> to vector<2x128xbf16>
    %cst_18 = arith.constant dense<0.000000e+00> : vector<2x384xf32>
    %24 = tpu.matmul %23, %2, %cst_18 {dimension_numbers = #tpu.dot_dimension_numbers<[1], [0], [0], [1], [0, 0, 1, 1], [], []>} : vector<2x128xbf16>, vector<128x384xbf16>, vector<2x384xf32> -> vector<2x384xf32>
    %25 = vector.extract_strided_slice %22 {offsets = [0, 0], sizes = [2, 128], strides = [1, 1]} : vector<2x384xf32> to vector<2x128xf32>
    %26 = vector.extract_strided_slice %24 {offsets = [0, 0], sizes = [2, 128], strides = [1, 1]} : vector<2x384xf32> to vector<2x128xf32>
    %27 = arith.addf %25, %26 : vector<2x128xf32>
    %28 = arith.negf %27 : vector<2x128xf32>
    %29 = math.exp %28 : vector<2x128xf32>
    %cst_19 = arith.constant 1.000000e+00 : f32
    %30 = vector.broadcast %cst_19 : f32 to vector<2x128xf32>
    %31 = arith.addf %30, %29 : vector<2x128xf32>
    %32 = arith.divf %30, %31 : vector<2x128xf32>
    %33 = vector.extract_strided_slice %22 {offsets = [0, 128], sizes = [2, 128], strides = [1, 1]} : vector<2x384xf32> to vector<2x128xf32>
    %34 = vector.extract_strided_slice %24 {offsets = [0, 128], sizes = [2, 128], strides = [1, 1]} : vector<2x384xf32> to vector<2x128xf32>
    %35 = arith.addf %33, %34 : vector<2x128xf32>
    %36 = arith.negf %35 : vector<2x128xf32>
    %37 = math.exp %36 : vector<2x128xf32>
    %cst_20 = arith.constant 1.000000e+00 : f32
    %38 = vector.broadcast %cst_20 : f32 to vector<2x128xf32>
    %39 = arith.addf %38, %37 : vector<2x128xf32>
    %40 = arith.divf %38, %39 : vector<2x128xf32>
    %41 = vector.extract_strided_slice %22 {offsets = [0, 256], sizes = [2, 128], strides = [1, 1]} : vector<2x384xf32> to vector<2x128xf32>
    %42 = vector.extract_strided_slice %24 {offsets = [0, 256], sizes = [2, 128], strides = [1, 1]} : vector<2x384xf32> to vector<2x128xf32>
    %43 = arith.addf %42, %8 : vector<2x128xf32>
    %44 = arith.mulf %32, %43 : vector<2x128xf32>
    %45 = arith.addf %41, %44 : vector<2x128xf32>
    %46 = math.tanh %45 : vector<2x128xf32>
    %cst_21 = arith.constant 1.000000e+00 : f32
    %47 = vector.broadcast %cst_21 : f32 to vector<2x128xf32>
    %48 = arith.subf %47, %40 : vector<2x128xf32>
    %49 = arith.mulf %48, %46 : vector<2x128xf32>
    %50 = arith.mulf %40, %15 : vector<2x128xf32>
    %51 = arith.addf %49, %50 : vector<2x128xf32>
    %52 = arith.mulf %51, %14 : vector<2x128xf32>
    %cst_22 = arith.constant dense<0.000000e+00> : vector<2xf32>
    %53 = vector.multi_reduction <add>, %52, %cst_22 [1] : vector<2x128xf32> to vector<2xf32>
    %54 = vector.shape_cast %53 : vector<2xf32> to vector<2x1xf32>
    %55 = arith.addf %54, %11 : vector<2x1xf32>
    %56 = vector.extract_strided_slice %0 {offsets = [0, 1, 0], sizes = [2, 1, 4], strides = [1, 1, 1]} : vector<2x8x4xf32> to vector<2x1x4xf32>
    %57 = vector.shape_cast %56 : vector<2x1x4xf32> to vector<2x4xf32>
    %58 = tpu.concatenate %57, %55 in 1 : vector<2x4xf32>, vector<2x1xf32> -> vector<2x5xf32>
    %59 = arith.truncf %58 : vector<2x5xf32> to vector<2x5xbf16>
    %cst_23 = arith.constant dense<0.000000e+00> : vector<2x384xf32>
    %60 = tpu.matmul %59, %1, %cst_23 {dimension_numbers = #tpu.dot_dimension_numbers<[1], [0], [0], [1], [0, 0, 1, 1], [], []>} : vector<2x5xbf16>, vector<5x384xbf16>, vector<2x384xf32> -> vector<2x384xf32>
    %61 = arith.addf %60, %5 : vector<2x384xf32>
    %62 = arith.truncf %51 : vector<2x128xf32> to vector<2x128xbf16>
    %cst_24 = arith.constant dense<0.000000e+00> : vector<2x384xf32>
    %63 = tpu.matmul %62, %2, %cst_24 {dimension_numbers = #tpu.dot_dimension_numbers<[1], [0], [0], [1], [0, 0, 1, 1], [], []>} : vector<2x128xbf16>, vector<128x384xbf16>, vector<2x384xf32> -> vector<2x384xf32>
    %64 = vector.extract_strided_slice %61 {offsets = [0, 0], sizes = [2, 128], strides = [1, 1]} : vector<2x384xf32> to vector<2x128xf32>
    %65 = vector.extract_strided_slice %63 {offsets = [0, 0], sizes = [2, 128], strides = [1, 1]} : vector<2x384xf32> to vector<2x128xf32>
    %66 = arith.addf %64, %65 : vector<2x128xf32>
    %67 = arith.negf %66 : vector<2x128xf32>
    %68 = math.exp %67 : vector<2x128xf32>
    %cst_25 = arith.constant 1.000000e+00 : f32
    %69 = vector.broadcast %cst_25 : f32 to vector<2x128xf32>
    %70 = arith.addf %69, %68 : vector<2x128xf32>
    %71 = arith.divf %69, %70 : vector<2x128xf32>
    %72 = vector.extract_strided_slice %61 {offsets = [0, 128], sizes = [2, 128], strides = [1, 1]} : vector<2x384xf32> to vector<2x128xf32>
    %73 = vector.extract_strided_slice %63 {offsets = [0, 128], sizes = [2, 128], strides = [1, 1]} : vector<2x384xf32> to vector<2x128xf32>
    %74 = arith.addf %72, %73 : vector<2x128xf32>
    %75 = arith.negf %74 : vector<2x128xf32>
    %76 = math.exp %75 : vector<2x128xf32>
    %cst_26 = arith.constant 1.000000e+00 : f32
    %77 = vector.broadcast %cst_26 : f32 to vector<2x128xf32>
    %78 = arith.addf %77, %76 : vector<2x128xf32>
    %79 = arith.divf %77, %78 : vector<2x128xf32>
    %80 = vector.extract_strided_slice %61 {offsets = [0, 256], sizes = [2, 128], strides = [1, 1]} : vector<2x384xf32> to vector<2x128xf32>
    %81 = vector.extract_strided_slice %63 {offsets = [0, 256], sizes = [2, 128], strides = [1, 1]} : vector<2x384xf32> to vector<2x128xf32>
    %82 = arith.addf %81, %8 : vector<2x128xf32>
    %83 = arith.mulf %71, %82 : vector<2x128xf32>
    %84 = arith.addf %80, %83 : vector<2x128xf32>
    %85 = math.tanh %84 : vector<2x128xf32>
    %cst_27 = arith.constant 1.000000e+00 : f32
    %86 = vector.broadcast %cst_27 : f32 to vector<2x128xf32>
    %87 = arith.subf %86, %79 : vector<2x128xf32>
    %88 = arith.mulf %87, %85 : vector<2x128xf32>
    %89 = arith.mulf %79, %51 : vector<2x128xf32>
    %90 = arith.addf %88, %89 : vector<2x128xf32>
    %91 = arith.mulf %90, %14 : vector<2x128xf32>
    %cst_28 = arith.constant dense<0.000000e+00> : vector<2xf32>
    %92 = vector.multi_reduction <add>, %91, %cst_28 [1] : vector<2x128xf32> to vector<2xf32>
    %93 = vector.shape_cast %92 : vector<2xf32> to vector<2x1xf32>
    %94 = arith.addf %93, %11 : vector<2x1xf32>
    %95 = vector.extract_strided_slice %0 {offsets = [0, 2, 0], sizes = [2, 1, 4], strides = [1, 1, 1]} : vector<2x8x4xf32> to vector<2x1x4xf32>
    %96 = vector.shape_cast %95 : vector<2x1x4xf32> to vector<2x4xf32>
    %97 = tpu.concatenate %96, %94 in 1 : vector<2x4xf32>, vector<2x1xf32> -> vector<2x5xf32>
    %98 = arith.truncf %97 : vector<2x5xf32> to vector<2x5xbf16>
    %cst_29 = arith.constant dense<0.000000e+00> : vector<2x384xf32>
    %99 = tpu.matmul %98, %1, %cst_29 {dimension_numbers = #tpu.dot_dimension_numbers<[1], [0], [0], [1], [0, 0, 1, 1], [], []>} : vector<2x5xbf16>, vector<5x384xbf16>, vector<2x384xf32> -> vector<2x384xf32>
    %100 = arith.addf %99, %5 : vector<2x384xf32>
    %101 = arith.truncf %90 : vector<2x128xf32> to vector<2x128xbf16>
    %cst_30 = arith.constant dense<0.000000e+00> : vector<2x384xf32>
    %102 = tpu.matmul %101, %2, %cst_30 {dimension_numbers = #tpu.dot_dimension_numbers<[1], [0], [0], [1], [0, 0, 1, 1], [], []>} : vector<2x128xbf16>, vector<128x384xbf16>, vector<2x384xf32> -> vector<2x384xf32>
    %103 = vector.extract_strided_slice %100 {offsets = [0, 0], sizes = [2, 128], strides = [1, 1]} : vector<2x384xf32> to vector<2x128xf32>
    %104 = vector.extract_strided_slice %102 {offsets = [0, 0], sizes = [2, 128], strides = [1, 1]} : vector<2x384xf32> to vector<2x128xf32>
    %105 = arith.addf %103, %104 : vector<2x128xf32>
    %106 = arith.negf %105 : vector<2x128xf32>
    %107 = math.exp %106 : vector<2x128xf32>
    %cst_31 = arith.constant 1.000000e+00 : f32
    %108 = vector.broadcast %cst_31 : f32 to vector<2x128xf32>
    %109 = arith.addf %108, %107 : vector<2x128xf32>
    %110 = arith.divf %108, %109 : vector<2x128xf32>
    %111 = vector.extract_strided_slice %100 {offsets = [0, 128], sizes = [2, 128], strides = [1, 1]} : vector<2x384xf32> to vector<2x128xf32>
    %112 = vector.extract_strided_slice %102 {offsets = [0, 128], sizes = [2, 128], strides = [1, 1]} : vector<2x384xf32> to vector<2x128xf32>
    %113 = arith.addf %111, %112 : vector<2x128xf32>
    %114 = arith.negf %113 : vector<2x128xf32>
    %115 = math.exp %114 : vector<2x128xf32>
    %cst_32 = arith.constant 1.000000e+00 : f32
    %116 = vector.broadcast %cst_32 : f32 to vector<2x128xf32>
    %117 = arith.addf %116, %115 : vector<2x128xf32>
    %118 = arith.divf %116, %117 : vector<2x128xf32>
    %119 = vector.extract_strided_slice %100 {offsets = [0, 256], sizes = [2, 128], strides = [1, 1]} : vector<2x384xf32> to vector<2x128xf32>
    %120 = vector.extract_strided_slice %102 {offsets = [0, 256], sizes = [2, 128], strides = [1, 1]} : vector<2x384xf32> to vector<2x128xf32>
    %121 = arith.addf %120, %8 : vector<2x128xf32>
    %122 = arith.mulf %110, %121 : vector<2x128xf32>
    %123 = arith.addf %119, %122 : vector<2x128xf32>
    %124 = math.tanh %123 : vector<2x128xf32>
    %cst_33 = arith.constant 1.000000e+00 : f32
    %125 = vector.broadcast %cst_33 : f32 to vector<2x128xf32>
    %126 = arith.subf %125, %118 : vector<2x128xf32>
    %127 = arith.mulf %126, %124 : vector<2x128xf32>
    %128 = arith.mulf %118, %90 : vector<2x128xf32>
    %129 = arith.addf %127, %128 : vector<2x128xf32>
    %130 = arith.mulf %129, %14 : vector<2x128xf32>
    %cst_34 = arith.constant dense<0.000000e+00> : vector<2xf32>
    %131 = vector.multi_reduction <add>, %130, %cst_34 [1] : vector<2x128xf32> to vector<2xf32>
    %132 = vector.shape_cast %131 : vector<2xf32> to vector<2x1xf32>
    %133 = arith.addf %132, %11 : vector<2x1xf32>
    %134 = vector.extract_strided_slice %0 {offsets = [0, 3, 0], sizes = [2, 1, 4], strides = [1, 1, 1]} : vector<2x8x4xf32> to vector<2x1x4xf32>
    %135 = vector.shape_cast %134 : vector<2x1x4xf32> to vector<2x4xf32>
    %136 = tpu.concatenate %135, %133 in 1 : vector<2x4xf32>, vector<2x1xf32> -> vector<2x5xf32>
    %137 = arith.truncf %136 : vector<2x5xf32> to vector<2x5xbf16>
    %cst_35 = arith.constant dense<0.000000e+00> : vector<2x384xf32>
    %138 = tpu.matmul %137, %1, %cst_35 {dimension_numbers = #tpu.dot_dimension_numbers<[1], [0], [0], [1], [0, 0, 1, 1], [], []>} : vector<2x5xbf16>, vector<5x384xbf16>, vector<2x384xf32> -> vector<2x384xf32>
    %139 = arith.addf %138, %5 : vector<2x384xf32>
    %140 = arith.truncf %129 : vector<2x128xf32> to vector<2x128xbf16>
    %cst_36 = arith.constant dense<0.000000e+00> : vector<2x384xf32>
    %141 = tpu.matmul %140, %2, %cst_36 {dimension_numbers = #tpu.dot_dimension_numbers<[1], [0], [0], [1], [0, 0, 1, 1], [], []>} : vector<2x128xbf16>, vector<128x384xbf16>, vector<2x384xf32> -> vector<2x384xf32>
    %142 = vector.extract_strided_slice %139 {offsets = [0, 0], sizes = [2, 128], strides = [1, 1]} : vector<2x384xf32> to vector<2x128xf32>
    %143 = vector.extract_strided_slice %141 {offsets = [0, 0], sizes = [2, 128], strides = [1, 1]} : vector<2x384xf32> to vector<2x128xf32>
    %144 = arith.addf %142, %143 : vector<2x128xf32>
    %145 = arith.negf %144 : vector<2x128xf32>
    %146 = math.exp %145 : vector<2x128xf32>
    %cst_37 = arith.constant 1.000000e+00 : f32
    %147 = vector.broadcast %cst_37 : f32 to vector<2x128xf32>
    %148 = arith.addf %147, %146 : vector<2x128xf32>
    %149 = arith.divf %147, %148 : vector<2x128xf32>
    %150 = vector.extract_strided_slice %139 {offsets = [0, 128], sizes = [2, 128], strides = [1, 1]} : vector<2x384xf32> to vector<2x128xf32>
    %151 = vector.extract_strided_slice %141 {offsets = [0, 128], sizes = [2, 128], strides = [1, 1]} : vector<2x384xf32> to vector<2x128xf32>
    %152 = arith.addf %150, %151 : vector<2x128xf32>
    %153 = arith.negf %152 : vector<2x128xf32>
    %154 = math.exp %153 : vector<2x128xf32>
    %cst_38 = arith.constant 1.000000e+00 : f32
    %155 = vector.broadcast %cst_38 : f32 to vector<2x128xf32>
    %156 = arith.addf %155, %154 : vector<2x128xf32>
    %157 = arith.divf %155, %156 : vector<2x128xf32>
    %158 = vector.extract_strided_slice %139 {offsets = [0, 256], sizes = [2, 128], strides = [1, 1]} : vector<2x384xf32> to vector<2x128xf32>
    %159 = vector.extract_strided_slice %141 {offsets = [0, 256], sizes = [2, 128], strides = [1, 1]} : vector<2x384xf32> to vector<2x128xf32>
    %160 = arith.addf %159, %8 : vector<2x128xf32>
    %161 = arith.mulf %149, %160 : vector<2x128xf32>
    %162 = arith.addf %158, %161 : vector<2x128xf32>
    %163 = math.tanh %162 : vector<2x128xf32>
    %cst_39 = arith.constant 1.000000e+00 : f32
    %164 = vector.broadcast %cst_39 : f32 to vector<2x128xf32>
    %165 = arith.subf %164, %157 : vector<2x128xf32>
    %166 = arith.mulf %165, %163 : vector<2x128xf32>
    %167 = arith.mulf %157, %129 : vector<2x128xf32>
    %168 = arith.addf %166, %167 : vector<2x128xf32>
    %169 = arith.mulf %168, %14 : vector<2x128xf32>
    %cst_40 = arith.constant dense<0.000000e+00> : vector<2xf32>
    %170 = vector.multi_reduction <add>, %169, %cst_40 [1] : vector<2x128xf32> to vector<2xf32>
    %171 = vector.shape_cast %170 : vector<2xf32> to vector<2x1xf32>
    %172 = arith.addf %171, %11 : vector<2x1xf32>
    %173 = vector.extract_strided_slice %0 {offsets = [0, 4, 0], sizes = [2, 1, 4], strides = [1, 1, 1]} : vector<2x8x4xf32> to vector<2x1x4xf32>
    %174 = vector.shape_cast %173 : vector<2x1x4xf32> to vector<2x4xf32>
    %175 = tpu.concatenate %174, %172 in 1 : vector<2x4xf32>, vector<2x1xf32> -> vector<2x5xf32>
    %176 = arith.truncf %175 : vector<2x5xf32> to vector<2x5xbf16>
    %cst_41 = arith.constant dense<0.000000e+00> : vector<2x384xf32>
    %177 = tpu.matmul %176, %1, %cst_41 {dimension_numbers = #tpu.dot_dimension_numbers<[1], [0], [0], [1], [0, 0, 1, 1], [], []>} : vector<2x5xbf16>, vector<5x384xbf16>, vector<2x384xf32> -> vector<2x384xf32>
    %178 = arith.addf %177, %5 : vector<2x384xf32>
    %179 = arith.truncf %168 : vector<2x128xf32> to vector<2x128xbf16>
    %cst_42 = arith.constant dense<0.000000e+00> : vector<2x384xf32>
    %180 = tpu.matmul %179, %2, %cst_42 {dimension_numbers = #tpu.dot_dimension_numbers<[1], [0], [0], [1], [0, 0, 1, 1], [], []>} : vector<2x128xbf16>, vector<128x384xbf16>, vector<2x384xf32> -> vector<2x384xf32>
    %181 = vector.extract_strided_slice %178 {offsets = [0, 0], sizes = [2, 128], strides = [1, 1]} : vector<2x384xf32> to vector<2x128xf32>
    %182 = vector.extract_strided_slice %180 {offsets = [0, 0], sizes = [2, 128], strides = [1, 1]} : vector<2x384xf32> to vector<2x128xf32>
    %183 = arith.addf %181, %182 : vector<2x128xf32>
    %184 = arith.negf %183 : vector<2x128xf32>
    %185 = math.exp %184 : vector<2x128xf32>
    %cst_43 = arith.constant 1.000000e+00 : f32
    %186 = vector.broadcast %cst_43 : f32 to vector<2x128xf32>
    %187 = arith.addf %186, %185 : vector<2x128xf32>
    %188 = arith.divf %186, %187 : vector<2x128xf32>
    %189 = vector.extract_strided_slice %178 {offsets = [0, 128], sizes = [2, 128], strides = [1, 1]} : vector<2x384xf32> to vector<2x128xf32>
    %190 = vector.extract_strided_slice %180 {offsets = [0, 128], sizes = [2, 128], strides = [1, 1]} : vector<2x384xf32> to vector<2x128xf32>
    %191 = arith.addf %189, %190 : vector<2x128xf32>
    %192 = arith.negf %191 : vector<2x128xf32>
    %193 = math.exp %192 : vector<2x128xf32>
    %cst_44 = arith.constant 1.000000e+00 : f32
    %194 = vector.broadcast %cst_44 : f32 to vector<2x128xf32>
    %195 = arith.addf %194, %193 : vector<2x128xf32>
    %196 = arith.divf %194, %195 : vector<2x128xf32>
    %197 = vector.extract_strided_slice %178 {offsets = [0, 256], sizes = [2, 128], strides = [1, 1]} : vector<2x384xf32> to vector<2x128xf32>
    %198 = vector.extract_strided_slice %180 {offsets = [0, 256], sizes = [2, 128], strides = [1, 1]} : vector<2x384xf32> to vector<2x128xf32>
    %199 = arith.addf %198, %8 : vector<2x128xf32>
    %200 = arith.mulf %188, %199 : vector<2x128xf32>
    %201 = arith.addf %197, %200 : vector<2x128xf32>
    %202 = math.tanh %201 : vector<2x128xf32>
    %cst_45 = arith.constant 1.000000e+00 : f32
    %203 = vector.broadcast %cst_45 : f32 to vector<2x128xf32>
    %204 = arith.subf %203, %196 : vector<2x128xf32>
    %205 = arith.mulf %204, %202 : vector<2x128xf32>
    %206 = arith.mulf %196, %168 : vector<2x128xf32>
    %207 = arith.addf %205, %206 : vector<2x128xf32>
    %208 = arith.mulf %207, %14 : vector<2x128xf32>
    %cst_46 = arith.constant dense<0.000000e+00> : vector<2xf32>
    %209 = vector.multi_reduction <add>, %208, %cst_46 [1] : vector<2x128xf32> to vector<2xf32>
    %210 = vector.shape_cast %209 : vector<2xf32> to vector<2x1xf32>
    %211 = arith.addf %210, %11 : vector<2x1xf32>
    %212 = vector.extract_strided_slice %0 {offsets = [0, 5, 0], sizes = [2, 1, 4], strides = [1, 1, 1]} : vector<2x8x4xf32> to vector<2x1x4xf32>
    %213 = vector.shape_cast %212 : vector<2x1x4xf32> to vector<2x4xf32>
    %214 = tpu.concatenate %213, %211 in 1 : vector<2x4xf32>, vector<2x1xf32> -> vector<2x5xf32>
    %215 = arith.truncf %214 : vector<2x5xf32> to vector<2x5xbf16>
    %cst_47 = arith.constant dense<0.000000e+00> : vector<2x384xf32>
    %216 = tpu.matmul %215, %1, %cst_47 {dimension_numbers = #tpu.dot_dimension_numbers<[1], [0], [0], [1], [0, 0, 1, 1], [], []>} : vector<2x5xbf16>, vector<5x384xbf16>, vector<2x384xf32> -> vector<2x384xf32>
    %217 = arith.addf %216, %5 : vector<2x384xf32>
    %218 = arith.truncf %207 : vector<2x128xf32> to vector<2x128xbf16>
    %cst_48 = arith.constant dense<0.000000e+00> : vector<2x384xf32>
    %219 = tpu.matmul %218, %2, %cst_48 {dimension_numbers = #tpu.dot_dimension_numbers<[1], [0], [0], [1], [0, 0, 1, 1], [], []>} : vector<2x128xbf16>, vector<128x384xbf16>, vector<2x384xf32> -> vector<2x384xf32>
    %220 = vector.extract_strided_slice %217 {offsets = [0, 0], sizes = [2, 128], strides = [1, 1]} : vector<2x384xf32> to vector<2x128xf32>
    %221 = vector.extract_strided_slice %219 {offsets = [0, 0], sizes = [2, 128], strides = [1, 1]} : vector<2x384xf32> to vector<2x128xf32>
    %222 = arith.addf %220, %221 : vector<2x128xf32>
    %223 = arith.negf %222 : vector<2x128xf32>
    %224 = math.exp %223 : vector<2x128xf32>
    %cst_49 = arith.constant 1.000000e+00 : f32
    %225 = vector.broadcast %cst_49 : f32 to vector<2x128xf32>
    %226 = arith.addf %225, %224 : vector<2x128xf32>
    %227 = arith.divf %225, %226 : vector<2x128xf32>
    %228 = vector.extract_strided_slice %217 {offsets = [0, 128], sizes = [2, 128], strides = [1, 1]} : vector<2x384xf32> to vector<2x128xf32>
    %229 = vector.extract_strided_slice %219 {offsets = [0, 128], sizes = [2, 128], strides = [1, 1]} : vector<2x384xf32> to vector<2x128xf32>
    %230 = arith.addf %228, %229 : vector<2x128xf32>
    %231 = arith.negf %230 : vector<2x128xf32>
    %232 = math.exp %231 : vector<2x128xf32>
    %cst_50 = arith.constant 1.000000e+00 : f32
    %233 = vector.broadcast %cst_50 : f32 to vector<2x128xf32>
    %234 = arith.addf %233, %232 : vector<2x128xf32>
    %235 = arith.divf %233, %234 : vector<2x128xf32>
    %236 = vector.extract_strided_slice %217 {offsets = [0, 256], sizes = [2, 128], strides = [1, 1]} : vector<2x384xf32> to vector<2x128xf32>
    %237 = vector.extract_strided_slice %219 {offsets = [0, 256], sizes = [2, 128], strides = [1, 1]} : vector<2x384xf32> to vector<2x128xf32>
    %238 = arith.addf %237, %8 : vector<2x128xf32>
    %239 = arith.mulf %227, %238 : vector<2x128xf32>
    %240 = arith.addf %236, %239 : vector<2x128xf32>
    %241 = math.tanh %240 : vector<2x128xf32>
    %cst_51 = arith.constant 1.000000e+00 : f32
    %242 = vector.broadcast %cst_51 : f32 to vector<2x128xf32>
    %243 = arith.subf %242, %235 : vector<2x128xf32>
    %244 = arith.mulf %243, %241 : vector<2x128xf32>
    %245 = arith.mulf %235, %207 : vector<2x128xf32>
    %246 = arith.addf %244, %245 : vector<2x128xf32>
    %247 = arith.mulf %246, %14 : vector<2x128xf32>
    %cst_52 = arith.constant dense<0.000000e+00> : vector<2xf32>
    %248 = vector.multi_reduction <add>, %247, %cst_52 [1] : vector<2x128xf32> to vector<2xf32>
    %249 = vector.shape_cast %248 : vector<2xf32> to vector<2x1xf32>
    %250 = arith.addf %249, %11 : vector<2x1xf32>
    %251 = vector.extract_strided_slice %0 {offsets = [0, 6, 0], sizes = [2, 1, 4], strides = [1, 1, 1]} : vector<2x8x4xf32> to vector<2x1x4xf32>
    %252 = vector.shape_cast %251 : vector<2x1x4xf32> to vector<2x4xf32>
    %253 = tpu.concatenate %252, %250 in 1 : vector<2x4xf32>, vector<2x1xf32> -> vector<2x5xf32>
    %254 = arith.truncf %253 : vector<2x5xf32> to vector<2x5xbf16>
    %cst_53 = arith.constant dense<0.000000e+00> : vector<2x384xf32>
    %255 = tpu.matmul %254, %1, %cst_53 {dimension_numbers = #tpu.dot_dimension_numbers<[1], [0], [0], [1], [0, 0, 1, 1], [], []>} : vector<2x5xbf16>, vector<5x384xbf16>, vector<2x384xf32> -> vector<2x384xf32>
    %256 = arith.addf %255, %5 : vector<2x384xf32>
    %257 = arith.truncf %246 : vector<2x128xf32> to vector<2x128xbf16>
    %cst_54 = arith.constant dense<0.000000e+00> : vector<2x384xf32>
    %258 = tpu.matmul %257, %2, %cst_54 {dimension_numbers = #tpu.dot_dimension_numbers<[1], [0], [0], [1], [0, 0, 1, 1], [], []>} : vector<2x128xbf16>, vector<128x384xbf16>, vector<2x384xf32> -> vector<2x384xf32>
    %259 = vector.extract_strided_slice %256 {offsets = [0, 0], sizes = [2, 128], strides = [1, 1]} : vector<2x384xf32> to vector<2x128xf32>
    %260 = vector.extract_strided_slice %258 {offsets = [0, 0], sizes = [2, 128], strides = [1, 1]} : vector<2x384xf32> to vector<2x128xf32>
    %261 = arith.addf %259, %260 : vector<2x128xf32>
    %262 = arith.negf %261 : vector<2x128xf32>
    %263 = math.exp %262 : vector<2x128xf32>
    %cst_55 = arith.constant 1.000000e+00 : f32
    %264 = vector.broadcast %cst_55 : f32 to vector<2x128xf32>
    %265 = arith.addf %264, %263 : vector<2x128xf32>
    %266 = arith.divf %264, %265 : vector<2x128xf32>
    %267 = vector.extract_strided_slice %256 {offsets = [0, 128], sizes = [2, 128], strides = [1, 1]} : vector<2x384xf32> to vector<2x128xf32>
    %268 = vector.extract_strided_slice %258 {offsets = [0, 128], sizes = [2, 128], strides = [1, 1]} : vector<2x384xf32> to vector<2x128xf32>
    %269 = arith.addf %267, %268 : vector<2x128xf32>
    %270 = arith.negf %269 : vector<2x128xf32>
    %271 = math.exp %270 : vector<2x128xf32>
    %cst_56 = arith.constant 1.000000e+00 : f32
    %272 = vector.broadcast %cst_56 : f32 to vector<2x128xf32>
    %273 = arith.addf %272, %271 : vector<2x128xf32>
    %274 = arith.divf %272, %273 : vector<2x128xf32>
    %275 = vector.extract_strided_slice %256 {offsets = [0, 256], sizes = [2, 128], strides = [1, 1]} : vector<2x384xf32> to vector<2x128xf32>
    %276 = vector.extract_strided_slice %258 {offsets = [0, 256], sizes = [2, 128], strides = [1, 1]} : vector<2x384xf32> to vector<2x128xf32>
    %277 = arith.addf %276, %8 : vector<2x128xf32>
    %278 = arith.mulf %266, %277 : vector<2x128xf32>
    %279 = arith.addf %275, %278 : vector<2x128xf32>
    %280 = math.tanh %279 : vector<2x128xf32>
    %cst_57 = arith.constant 1.000000e+00 : f32
    %281 = vector.broadcast %cst_57 : f32 to vector<2x128xf32>
    %282 = arith.subf %281, %274 : vector<2x128xf32>
    %283 = arith.mulf %282, %280 : vector<2x128xf32>
    %284 = arith.mulf %274, %246 : vector<2x128xf32>
    %285 = arith.addf %283, %284 : vector<2x128xf32>
    %286 = arith.mulf %285, %14 : vector<2x128xf32>
    %cst_58 = arith.constant dense<0.000000e+00> : vector<2xf32>
    %287 = vector.multi_reduction <add>, %286, %cst_58 [1] : vector<2x128xf32> to vector<2xf32>
    %288 = vector.shape_cast %287 : vector<2xf32> to vector<2x1xf32>
    %289 = arith.addf %288, %11 : vector<2x1xf32>
    %290 = vector.extract_strided_slice %0 {offsets = [0, 7, 0], sizes = [2, 1, 4], strides = [1, 1, 1]} : vector<2x8x4xf32> to vector<2x1x4xf32>
    %291 = vector.shape_cast %290 : vector<2x1x4xf32> to vector<2x4xf32>
    %292 = tpu.concatenate %291, %289 in 1 : vector<2x4xf32>, vector<2x1xf32> -> vector<2x5xf32>
    %293 = arith.truncf %292 : vector<2x5xf32> to vector<2x5xbf16>
    %cst_59 = arith.constant dense<0.000000e+00> : vector<2x384xf32>
    %294 = tpu.matmul %293, %1, %cst_59 {dimension_numbers = #tpu.dot_dimension_numbers<[1], [0], [0], [1], [0, 0, 1, 1], [], []>} : vector<2x5xbf16>, vector<5x384xbf16>, vector<2x384xf32> -> vector<2x384xf32>
    %295 = arith.addf %294, %5 : vector<2x384xf32>
    %296 = arith.truncf %285 : vector<2x128xf32> to vector<2x128xbf16>
    %cst_60 = arith.constant dense<0.000000e+00> : vector<2x384xf32>
    %297 = tpu.matmul %296, %2, %cst_60 {dimension_numbers = #tpu.dot_dimension_numbers<[1], [0], [0], [1], [0, 0, 1, 1], [], []>} : vector<2x128xbf16>, vector<128x384xbf16>, vector<2x384xf32> -> vector<2x384xf32>
    %298 = vector.extract_strided_slice %295 {offsets = [0, 0], sizes = [2, 128], strides = [1, 1]} : vector<2x384xf32> to vector<2x128xf32>
    %299 = vector.extract_strided_slice %297 {offsets = [0, 0], sizes = [2, 128], strides = [1, 1]} : vector<2x384xf32> to vector<2x128xf32>
    %300 = arith.addf %298, %299 : vector<2x128xf32>
    %301 = arith.negf %300 : vector<2x128xf32>
    %302 = math.exp %301 : vector<2x128xf32>
    %cst_61 = arith.constant 1.000000e+00 : f32
    %303 = vector.broadcast %cst_61 : f32 to vector<2x128xf32>
    %304 = arith.addf %303, %302 : vector<2x128xf32>
    %305 = arith.divf %303, %304 : vector<2x128xf32>
    %306 = vector.extract_strided_slice %295 {offsets = [0, 128], sizes = [2, 128], strides = [1, 1]} : vector<2x384xf32> to vector<2x128xf32>
    %307 = vector.extract_strided_slice %297 {offsets = [0, 128], sizes = [2, 128], strides = [1, 1]} : vector<2x384xf32> to vector<2x128xf32>
    %308 = arith.addf %306, %307 : vector<2x128xf32>
    %309 = arith.negf %308 : vector<2x128xf32>
    %310 = math.exp %309 : vector<2x128xf32>
    %cst_62 = arith.constant 1.000000e+00 : f32
    %311 = vector.broadcast %cst_62 : f32 to vector<2x128xf32>
    %312 = arith.addf %311, %310 : vector<2x128xf32>
    %313 = arith.divf %311, %312 : vector<2x128xf32>
    %314 = vector.extract_strided_slice %295 {offsets = [0, 256], sizes = [2, 128], strides = [1, 1]} : vector<2x384xf32> to vector<2x128xf32>
    %315 = vector.extract_strided_slice %297 {offsets = [0, 256], sizes = [2, 128], strides = [1, 1]} : vector<2x384xf32> to vector<2x128xf32>
    %316 = arith.addf %315, %8 : vector<2x128xf32>
    %317 = arith.mulf %305, %316 : vector<2x128xf32>
    %318 = arith.addf %314, %317 : vector<2x128xf32>
    %319 = math.tanh %318 : vector<2x128xf32>
    %cst_63 = arith.constant 1.000000e+00 : f32
    %320 = vector.broadcast %cst_63 : f32 to vector<2x128xf32>
    %321 = arith.subf %320, %313 : vector<2x128xf32>
    %322 = arith.mulf %321, %319 : vector<2x128xf32>
    %323 = arith.mulf %313, %285 : vector<2x128xf32>
    %324 = arith.addf %322, %323 : vector<2x128xf32>
    %325 = arith.mulf %324, %14 : vector<2x128xf32>
    %cst_64 = arith.constant dense<0.000000e+00> : vector<2xf32>
    %326 = vector.multi_reduction <add>, %325, %cst_64 [1] : vector<2x128xf32> to vector<2xf32>
    %327 = vector.shape_cast %326 : vector<2xf32> to vector<2x1xf32>
    %328 = arith.addf %327, %11 : vector<2x1xf32>
    %329 = tpu.concatenate %55, %94, %133, %172, %211, %250, %289, %328 in 1 : vector<2x1xf32>, vector<2x1xf32>, vector<2x1xf32>, vector<2x1xf32>, vector<2x1xf32>, vector<2x1xf32>, vector<2x1xf32>, vector<2x1xf32> -> vector<2x8xf32>
    %c0_65 = arith.constant 0 : index
    %c0_66 = arith.constant 0 : index
    %330 = vector.load %arg10[%c0_65, %c0_66] : memref<2x8xf32, #tpu.memory_space<vmem>>, vector<2x8xf32>
    tpu.vector_store %arg10[%c0_65, %c0_66], %329 {strides = array<i32>} : memref<2x8xf32, #tpu.memory_space<vmem>>, vector<2x8xf32>,
    return
  }
  func.func @transform_0(%arg0: i32) -> (i32, i32, i32) {
    %c0_i32 = arith.constant 0 : i32
    %c0_i32_0 = arith.constant 0 : i32
    %c0_i32_1 = arith.constant 0 : i32
    %c0_i32_2 = arith.constant 0 : i32
    return %c0_i32, %c0_i32_0, %c0_i32_1 : i32, i32, i32
  }
  func.func @transform_1(%arg0: i32) -> (i32, i32) {
    %c0_i32 = arith.constant 0 : i32
    %c0_i32_0 = arith.constant 0 : i32
    %c0_i32_1 = arith.constant 0 : i32
    return %c0_i32, %c0_i32_0 : i32, i32
  }
  func.func @transform_2(%arg0: i32) -> (i32, i32) {
    %c0_i32 = arith.constant 0 : i32
    %c0_i32_0 = arith.constant 0 : i32
    %c0_i32_1 = arith.constant 0 : i32
    return %c0_i32, %c0_i32_0 : i32, i32
  }
  func.func @transform_3(%arg0: i32) -> (i32, i32) {
    %c0_i32 = arith.constant 0 : i32
    %c0_i32_0 = arith.constant 0 : i32
    %c0_i32_1 = arith.constant 0 : i32
    return %c0_i32, %c0_i32_0 : i32, i32
  }
  func.func @transform_4(%arg0: i32) -> (i32, i32) {
    %c0_i32 = arith.constant 0 : i32
    %c0_i32_0 = arith.constant 0 : i32
    %c0_i32_1 = arith.constant 0 : i32
    return %c0_i32, %c0_i32_0 : i32, i32
  }
  func.func @transform_5(%arg0: i32) -> (i32, i32) {
    %c0_i32 = arith.constant 0 : i32
    %c0_i32_0 = arith.constant 0 : i32
    %c0_i32_1 = arith.constant 0 : i32
    return %c0_i32, %c0_i32_0 : i32, i32
  }
  func.func @transform_6(%arg0: i32) -> (i32, i32) {
    %c0_i32 = arith.constant 0 : i32
    %c0_i32_0 = arith.constant 0 : i32
    %c0_i32_1 = arith.constant 0 : i32
    return %c0_i32, %c0_i32_0 : i32, i32
  }
  func.func @transform_7(%arg0: i32) -> (i32, i32) {
    %c0_i32 = arith.constant 0 : i32
    %c0_i32_0 = arith.constant 0 : i32
    %c0_i32_1 = arith.constant 0 : i32
    return %c0_i32, %c0_i32_0 : i32, i32
  }
  func.func @transform_8(%arg0: i32) -> (i32, i32) {
    %c0_i32 = arith.constant 0 : i32
    %c0_i32_0 = arith.constant 0 : i32
    %c0_i32_1 = arith.constant 0 : i32
    return %c0_i32, %c0_i32_0 : i32, i32
  }
  func.func @transform_9(%arg0: i32) -> (i32, i32) {
    %c0_i32 = arith.constant 0 : i32
    %c0_i32_0 = arith.constant 0 : i32
    %c0_i32_1 = arith.constant 0 : i32
    return %c0_i32, %c0_i32_0 : i32, i32
  }
}

</mosaic_0001>

<llo_original>
// kernel: tpu_custom_call.1
$region0: #{tpu_custom_call.1}
  #allocation0 [shape = 'u32[]', space=smem, size = 0x4, offset = 0x4, fixed_abs, tag = 'smem constant byte address 0x4 - core index']
  #allocation1 [shape = 'u32[144,128]{1,0:T(1,128)}', space=vmem, size = 0x12000, scoped, tag = 'internal scratch']
  #allocation2 [shape = 'f32[1,1]{1,0:T(1,128)S(1)}', space=vmem, size = 0x200, scoped, tag = 'scoped memory for tpu_custom_call.1']
  %s0 = inlined_call_operand.vmem [shape: f32[2,8,4], index: 0, kind: input, shape index: {}]
  %s1 = inlined_call_operand.vmem [shape: f32[2,1], index: 1, kind: input, shape index: {}]
  %s2 = inlined_call_operand.vmem [shape: f32[2,128], index: 2, kind: input, shape index: {}]
  %s3 = inlined_call_operand.vmem [shape: bf16[5,384], index: 3, kind: input, shape index: {}]
  %s4 = inlined_call_operand.hbm [shape: bf16[128,384], index: 4, kind: input, shape index: {}]
  %s5 = inlined_call_operand.vmem [shape: f32[1,384], index: 5, kind: input, shape index: {}]
  %s6 = inlined_call_operand.vmem [shape: f32[1,128], index: 6, kind: input, shape index: {}]
  %s7 = inlined_call_operand.vmem [shape: f32[1,128], index: 7, kind: input, shape index: {}]
  %s8 = inlined_call_operand.<no memory space> [shape: f32[1,1], index: 8, kind: input, shape index: {}]
  %s9 = inlined_call_operand.hbm [shape: f32[2,8], index: 9, kind: output, shape index: {}]
  %s10 = sld [smem:[#allocation0]]
  $region50: #{tpu_custom_call.1} parent=0
    _
  %s12 = ssub.s32 1, %s10
  %s13 = scalar_select 0, %s12, %s10
  %v14 = vstv %s8
  %15 = vst [vmem:[#allocation2] sm:$0x1] %v14
  $region1: #{tpu_custom_call.1} parent=0
    #allocation3 [shape = 'u8[98304]{0}', space=vmem, size = 0x18000, scoped, tag = 'input window, operand 4, single buffered']
    #allocation4 [shape = 's32[1]{0}', space=sflag, size = 0x4, scoped, tag = 'scoped memory for tpu_custom_call.1']
    #allocation5 [shape = 's32[1]{0}', space=sflag, size = 0x4, scoped, tag = 'scoped memory for tpu_custom_call.1']
    #allocation6 [shape = 'u8[1024]{0}', space=vmem, size = 0x400, scoped, tag = 'output window, operand 0, single buffered']
    %16 = vsyncpa [#allocation4], 0
    %17 = vsyncpa [#allocation5], 0
    // Predicated region
    $region2: #{tpu_custom_call.1} parent=1 // pred_check
      _
    $region3: #{tpu_custom_call.1} parent=1 // pred_check_branch
      %19 = sbr.rel (0) target = $region5
    $region4: #{tpu_custom_call.1} parent=1 // pred_region
      _
    $region5: #{tpu_custom_call.1} parent=1 // pred_fallthru
      _
    // Predicated region
    $region6: #{tpu_custom_call.1} parent=1 // pred_check
      _
    $region7: #{tpu_custom_call.1} parent=1 // pred_check_branch
      %21 = sbr.rel (0) target = $region9
    $region8: #{tpu_custom_call.1} parent=1 // pred_region
      _
    $region9: #{tpu_custom_call.1} parent=1 // pred_fallthru
      _
    // Predicated region
    $region10: #{tpu_custom_call.1} parent=1 // pred_check
      _
    $region11: #{tpu_custom_call.1} parent=1 // pred_check_branch
      %23 = sbr.rel (0) target = $region13
    $region12: #{tpu_custom_call.1} parent=1 // pred_region
      _
    $region13: #{tpu_custom_call.1} parent=1 // pred_fallthru
      _
    // Predicated region
    $region14: #{tpu_custom_call.1} parent=1 // pred_check
      _
    $region15: #{tpu_custom_call.1} parent=1 // pred_check_branch
      %25 = sbr.rel (0) target = $region17
    $region16: #{tpu_custom_call.1} parent=1 // pred_region
      _
    $region17: #{tpu_custom_call.1} parent=1 // pred_fallthru
      _
    // Predicated region
    $region18: #{tpu_custom_call.1} parent=1 // pred_check
      _
    $region19: #{tpu_custom_call.1} parent=1 // pred_check_branch
      %27 = sbr.rel (0) target = $region21
    $region20: #{tpu_custom_call.1} parent=1 // pred_region
      %s29 = ssub.s32 3072, 3072
      %30 = vsyncadd [#allocation4], %s29
      %s31 = sshll.u32 [#allocation3], 4
      %s32 = int_to_ptr.vmem [resolvable:$true] %s31
      %37 = dma.hbm_to_vmem [thread:$0]  %s4, 3072, %s32, [#allocation4], 192, 192, 12
    $region21: #{tpu_custom_call.1} parent=1 // pred_fallthru
      _
    // Predicated region
    $region22: #{tpu_custom_call.1} parent=1 // pred_check
      _
    $region23: #{tpu_custom_call.1} parent=1 // pred_check_branch
      %39 = sbr.rel (0) target = $region25
    $region24: #{tpu_custom_call.1} parent=1 // pred_region
      _
    $region25: #{tpu_custom_call.1} parent=1 // pred_fallthru
      _
    // Predicated region
    $region26: #{tpu_custom_call.1} parent=1 // pred_check
      _
    $region27: #{tpu_custom_call.1} parent=1 // pred_check_branch
      %41 = sbr.rel (0) target = $region29
    $region28: #{tpu_custom_call.1} parent=1 // pred_region
      _
    $region29: #{tpu_custom_call.1} parent=1 // pred_fallthru
      _
    // Predicated region
    $region30: #{tpu_custom_call.1} parent=1 // pred_check
      _
    $region31: #{tpu_custom_call.1} parent=1 // pred_check_branch
      %43 = sbr.rel (0) target = $region33
    $region32: #{tpu_custom_call.1} parent=1 // pred_region
      _
    $region33: #{tpu_custom_call.1} parent=1 // pred_fallthru
      _
    // Predicated region
    $region34: #{tpu_custom_call.1} parent=1 // pred_check
      _
    $region35: #{tpu_custom_call.1} parent=1 // pred_check_branch
      %45 = sbr.rel (0) target = $region37
    $region36: #{tpu_custom_call.1} parent=1 // pred_region
      _
    $region37: #{tpu_custom_call.1} parent=1 // pred_fallthru
      _
    // Predicated region
    $region38: #{tpu_custom_call.1} parent=1 // pred_check
      _
    $region39: #{tpu_custom_call.1} parent=1 // pred_check_branch
      %47 = sbr.rel (0) target = $region41
    $region40: #{tpu_custom_call.1} parent=1 // pred_region
      %48 = dma.done [#allocation4], 3072
    $region41: #{tpu_custom_call.1} parent=1 // pred_fallthru
      _
    %v50 = vld [vmem:[%s0] sm:$0xff]
    %v51 = vld [vmem:[%s0 + $0x8] sm:$0xff]
    %v52 = vld [vmem:[%s3] sm:$0x77]
    %v53 = vld [vmem:[%s3 + $0x8] sm:$0x7]
    %v54 = vld [vmem:[#allocation3] sm:$0xff]
    %v55 = vld [vmem:[#allocation3 + $0x8] sm:$0xf]
    %v56 = vld [vmem:[#allocation3 + $0xc] sm:$0xff]
    %v57 = vld [vmem:[#allocation3 + $0x14] sm:$0xf]
    %v58 = vld [vmem:[#allocation3 + $0x18] sm:$0xff]
    %v59 = vld [vmem:[#allocation3 + $0x20] sm:$0xf]
    %v60 = vld [vmem:[#allocation3 + $0x24] sm:$0xff]
    %v61 = vld [vmem:[#allocation3 + $0x2c] sm:$0xf]
    %v62 = vld [vmem:[#allocation3 + $0x30] sm:$0xff]
    %v63 = vld [vmem:[#allocation3 + $0x38] sm:$0xf]
    %v64 = vld [vmem:[#allocation3 + $0x3c] sm:$0xff]
    %v65 = vld [vmem:[#allocation3 + $0x44] sm:$0xf]
    %v66 = vld [vmem:[#allocation3 + $0x48] sm:$0xff]
    %v67 = vld [vmem:[#allocation3 + $0x50] sm:$0xf]
    %v68 = vld [vmem:[#allocation3 + $0x54] sm:$0xff]
    %v69 = vld [vmem:[#allocation3 + $0x5c] sm:$0xf]
    %v70 = vld [vmem:[#allocation3 + $0x60] sm:$0xff]
    %v71 = vld [vmem:[#allocation3 + $0x68] sm:$0xf]
    %v72 = vld [vmem:[#allocation3 + $0x6c] sm:$0xff]
    %v73 = vld [vmem:[#allocation3 + $0x74] sm:$0xf]
    %v74 = vld [vmem:[#allocation3 + $0x78] sm:$0xff]
    %v75 = vld [vmem:[#allocation3 + $0x80] sm:$0xf]
    %v76 = vld [vmem:[#allocation3 + $0x84] sm:$0xff]
    %v77 = vld [vmem:[#allocation3 + $0x8c] sm:$0xf]
    %v78 = vld [vmem:[#allocation3 + $0x90] sm:$0xff]
    %v79 = vld [vmem:[#allocation3 + $0x98] sm:$0xf]
    %v80 = vld [vmem:[#allocation3 + $0x9c] sm:$0xff]
    %v81 = vld [vmem:[#allocation3 + $0xa4] sm:$0xf]
    %v82 = vld [vmem:[#allocation3 + $0xa8] sm:$0xff]
    %v83 = vld [vmem:[#allocation3 + $0xb0] sm:$0xf]
    %v84 = vld [vmem:[#allocation3 + $0xb4] sm:$0xff]
    %v85 = vld [vmem:[#allocation3 + $0xbc] sm:$0xf]
    %v86 = vld [vmem:[%s5] sm:$0x7]
    %v88 = vlaneseq
    %v89 = vshrl.u32 %v88, 7
    %v90 = vsub.s32 0, %v89
    %v91 = vrot.slane %v86, %v90
    %v92 = vlaneseq
    %v93 = vshrl.u32 %v92, 7
    %v94 = vsub.s32 1, %v93
    %v95 = vrot.slane %v86, %v94
    %v96 = vlaneseq
    %v97 = vshrl.u32 %v96, 7
    %v98 = vsub.s32 2, %v97
    %v99 = vrot.slane %v86, %v98
    %v103 = vld [vmem:[%s6] sm:$0x1]
    %v105 = vlaneseq
    %v106 = vshrl.u32 %v105, 7
    %v107 = vsub.s32 0, %v106
    %v108 = vrot.slane %v103, %v107
    %v110 = vld [vmem:[#allocation2] sm:$0x1]
    %v112 = vlaneseq
    %v113 = vshrl.u32 %v112, 7
    %v114 = vsub.s32 0, %v113
    %v115 = vrot.slane %v110, %v114
    %v117 = vld [vmem:[%s7] sm:$0x1]
    %v119 = vlaneseq
    %v120 = vshrl.u32 %v119, 7
    %v121 = vsub.s32 0, %v120
    %v122 = vrot.slane %v117, %v121
    %v124 = vld [vmem:[%s2] sm:$0x3]
    %v125 = vld [vmem:[%s1] sm:$0x3]
    %v128 = vrot.slane %v51, 7
    %vm129 = vcmask 1041409
    %v130 = vsel %vm129, %v128, %v50
    %133 = vrot.lane.b32.xlu0 %v125, 4
    %v134 = vpop.permute.xlu0 %133
    %vm136 = vcmask 31744
    %v137 = vsel %vm136, %v130, %v134
    %v138 = vpack.c.bf16 %v137, %v137
    %v141 = vunpack.c.l.b16 %v52
    %v142 = vunpack.c.h.b16 %v52
    %v143 = vunpack.c.l.b16 %v53
    %v144 = vpack.c.b16 %v141, %v141
    %v145 = vpack.c.b16 %v142, %v142
    %v146 = vpack.c.b16 %v143, %v143
    %vm147 = vcmask 39936
    %v149 = vsel %vm147, %v138, 0
    %vm151 = vcmask 1041408
    %vm152 = vcmask 1042432
    %v153 = vsel %vm151, 4294967295, 65535
    %v154 = vsel %vm152, %v153, 0
    %v156 = vand.u32 %v144, %v154
    %v159 = vand.u32 %v145, %v154
    %v162 = vand.u32 %v146, %v154
    %164 = vmatprep.subr.bf16.mxu0 0
    %165 = vmatpush1.bf16.msra.mxu0 0
    %166 = vmatprep.subr.bf16.mxu0 0
    %167 = vmatpush1.bf16.msra.mxu0 0
    %168 = vmatprep.subr.bf16.mxu0 0
    %169 = vmatpush1.bf16.msra.mxu0 0
    %170 = vmatprep.subr.bf16.mxu0 0
    %171 = vmatpush1.bf16.msra.mxu0 0
    %172 = vmatprep.subr.bf16.mxu0 0
    %173 = vmatpush1.bf16.msra.mxu0 0
    %174 = vmatprep.subr.bf16.mxu0 0
    %175 = vmatpush1.bf16.msra.mxu0 0
    %176 = vmatprep.subr.bf16.mxu0 0
    %177 = vmatpush1.bf16.msra.mxu0 0
    %178 = vmatprep.subr.bf16.mxu0 %v159
    %179 = vmatpush1.bf16.msra.mxu0 %v156
    %180 = vmatprep.subr.bf16.mxu0 0
    %181 = vmatpush2.bf16.msra.mxu0 0
    %182 = vmatprep.subr.bf16.mxu0 0
    %183 = vmatpush2.bf16.msra.mxu0 0
    %184 = vmatprep.subr.bf16.mxu0 0
    %185 = vmatpush2.bf16.msra.mxu0 0
    %186 = vmatprep.subr.bf16.mxu0 0
    %187 = vmatpush2.bf16.msra.mxu0 0
    %188 = vmatprep.subr.bf16.mxu0 0
    %189 = vmatpush2.bf16.msra.mxu0 0
    %190 = vmatprep.subr.bf16.mxu0 0
    %191 = vmatpush2.bf16.msra.mxu0 0
    %192 = vmatprep.subr.bf16.mxu0 0
    %193 = vmatpush2.bf16.msra.mxu0 0
    %194 = vmatprep.subr.bf16.mxu0 0
    %195 = vmatpush2.bf16.msra.mxu0 0
    %196 = vmatprep.mubr.bf16.mxu0 0
    %197 = vmatmul.mubr.bf16.gmra.mxu0 %v149
    %v198 = vpop.f32.mrf.mxu0
    %v199 = vadd.f32 %v91, %v198
    %v200 = vpop.f32.mrf.mxu0
    %v201 = vadd.f32 %v95, %v200
    %v202 = vpop.f32.mrf.mxu0
    %v203 = vpop.f32.mrf.mxu0
    %204 = vdwg.mxu0
    %205 = vmatprep.subr.bf16.mxu0 0
    %206 = vmatpush1.bf16.msra.mxu0 0
    %207 = vmatprep.subr.bf16.mxu0 0
    %208 = vmatpush1.bf16.msra.mxu0 0
    %209 = vmatprep.subr.bf16.mxu0 0
    %210 = vmatpush1.bf16.msra.mxu0 0
    %211 = vmatprep.subr.bf16.mxu0 0
    %212 = vmatpush1.bf16.msra.mxu0 0
    %213 = vmatprep.subr.bf16.mxu0 0
    %214 = vmatpush1.bf16.msra.mxu0 0
    %215 = vmatprep.subr.bf16.mxu0 0
    %216 = vmatpush1.bf16.msra.mxu0 0
    %217 = vmatprep.subr.bf16.mxu0 0
    %218 = vmatpush1.bf16.msra.mxu0 0
    %219 = vmatprep.subr.bf16.mxu0 0
    %220 = vmatpush1.bf16.msra.mxu0 %v162
    %221 = vmatprep.subr.bf16.mxu0 0
    %222 = vmatpush2.bf16.msra.mxu0 0
    %223 = vmatprep.subr.bf16.mxu0 0
    %224 = vmatpush2.bf16.msra.mxu0 0
    %225 = vmatprep.subr.bf16.mxu0 0
    %226 = vmatpush2.bf16.msra.mxu0 0
    %227 = vmatprep.subr.bf16.mxu0 0
    %228 = vmatpush2.bf16.msra.mxu0 0
    %229 = vmatprep.subr.bf16.mxu0 0
    %230 = vmatpush2.bf16.msra.mxu0 0
    %231 = vmatprep.subr.bf16.mxu0 0
    %232 = vmatpush2.bf16.msra.mxu0 0
    %233 = vmatprep.subr.bf16.mxu0 0
    %234 = vmatpush2.bf16.msra.mxu0 0
    %235 = vmatprep.subr.bf16.mxu0 0
    %236 = vmatpush2.bf16.msra.mxu0 0
    %237 = vmatprep.mubr.bf16.mxu0 0
    %238 = vmatmul.mubr.bf16.gmra.mxu0 %v149
    %v239 = vpop.f32.mrf.mxu0
    %v240 = vadd.f32 %v99, %v239
    %v241 = vpop.f32.mrf.mxu0
    %v242 = vpop.f32.mrf.mxu0
    %v243 = vpop.f32.mrf.mxu0
    %244 = vdwg.mxu0
    %v245 = vpack.c.bf16 %v124, %v124
    %v278 = vunpack.c.l.b16 %v54
    %v279 = vunpack.c.h.b16 %v54
    %v280 = vunpack.c.l.b16 %v55
    %v281 = vunpack.c.l.b16 %v56
    %v282 = vunpack.c.h.b16 %v56
    %v283 = vunpack.c.l.b16 %v57
    %v284 = vunpack.c.l.b16 %v58
    %v285 = vunpack.c.h.b16 %v58
    %v286 = vunpack.c.l.b16 %v59
    %v287 = vunpack.c.l.b16 %v60
    %v288 = vunpack.c.h.b16 %v60
    %v289 = vunpack.c.l.b16 %v61
    %v290 = vunpack.c.l.b16 %v62
    %v291 = vunpack.c.h.b16 %v62
    %v292 = vunpack.c.l.b16 %v63
    %v293 = vunpack.c.l.b16 %v64
    %v294 = vunpack.c.h.b16 %v64
    %v295 = vunpack.c.l.b16 %v65
    %v296 = vunpack.c.l.b16 %v66
    %v297 = vunpack.c.h.b16 %v66
    %v298 = vunpack.c.l.b16 %v67
    %v299 = vunpack.c.l.b16 %v68
    %v300 = vunpack.c.h.b16 %v68
    %v301 = vunpack.c.l.b16 %v69
    %v302 = vunpack.c.l.b16 %v70
    %v303 = vunpack.c.h.b16 %v70
    %v304 = vunpack.c.l.b16 %v71
    %v305 = vunpack.c.l.b16 %v72
    %v306 = vunpack.c.h.b16 %v72
    %v307 = vunpack.c.l.b16 %v73
    %v308 = vunpack.c.l.b16 %v74
    %v309 = vunpack.c.h.b16 %v74
    %v310 = vunpack.c.l.b16 %v75
    %v311 = vunpack.c.l.b16 %v76
    %v312 = vunpack.c.h.b16 %v76
    %v313 = vunpack.c.l.b16 %v77
    %v314 = vunpack.c.l.b16 %v78
    %v315 = vunpack.c.h.b16 %v78
    %v316 = vunpack.c.l.b16 %v79
    %v317 = vunpack.c.l.b16 %v80
    %v318 = vunpack.c.h.b16 %v80
    %v319 = vunpack.c.l.b16 %v81
    %v320 = vunpack.c.l.b16 %v82
    %v321 = vunpack.c.h.b16 %v82
    %v322 = vunpack.c.l.b16 %v83
    %v323 = vunpack.c.l.b16 %v84
    %v324 = vunpack.c.h.b16 %v84
    %v325 = vunpack.c.l.b16 %v85
    %v326 = vpack.c.b16 %v281, %v278
    %v327 = vpack.c.b16 %v282, %v279
    %v328 = vpack.c.b16 %v283, %v280
    %v329 = vpack.c.b16 %v287, %v284
    %v330 = vpack.c.b16 %v288, %v285
    %v331 = vpack.c.b16 %v289, %v286
    %v332 = vpack.c.b16 %v293, %v290
    %v333 = vpack.c.b16 %v294, %v291
    %v334 = vpack.c.b16 %v295, %v292
    %v335 = vpack.c.b16 %v299, %v296
    %v336 = vpack.c.b16 %v300, %v297
    %v337 = vpack.c.b16 %v301, %v298
    %v338 = vpack.c.b16 %v305, %v302
    %v339 = vpack.c.b16 %v306, %v303
    %v340 = vpack.c.b16 %v307, %v304
    %v341 = vpack.c.b16 %v311, %v308
    %v342 = vpack.c.b16 %v312, %v309
    %v343 = vpack.c.b16 %v313, %v310
    %v344 = vpack.c.b16 %v317, %v314
    %v345 = vpack.c.b16 %v318, %v315
    %v346 = vpack.c.b16 %v319, %v316
    %v347 = vpack.c.b16 %v323, %v320
    %v348 = vpack.c.b16 %v324, %v321
    %v349 = vpack.c.b16 %v325, %v322
    %374 = vmatprep.subr.bf16.mxu0 %v348
    %375 = vmatpush1.bf16.msra.mxu0 %v347
    %376 = vmatprep.subr.bf16.mxu0 %v345
    %377 = vmatpush1.bf16.msra.mxu0 %v344
    %378 = vmatprep.subr.bf16.mxu0 %v342
    %379 = vmatpush1.bf16.msra.mxu0 %v341
    %380 = vmatprep.subr.bf16.mxu0 %v339
    %381 = vmatpush1.bf16.msra.mxu0 %v338
    %382 = vmatprep.subr.bf16.mxu0 %v336
    %383 = vmatpush1.bf16.msra.mxu0 %v335
    %384 = vmatprep.subr.bf16.mxu0 %v333
    %385 = vmatpush1.bf16.msra.mxu0 %v332
    %386 = vmatprep.subr.bf16.mxu0 %v330
    %387 = vmatpush1.bf16.msra.mxu0 %v329
    %388 = vmatprep.subr.bf16.mxu0 %v327
    %389 = vmatpush1.bf16.msra.mxu0 %v326
    %390 = vmatprep.subr.bf16.mxu0 0
    %391 = vmatpush2.bf16.msra.mxu0 0
    %392 = vmatprep.subr.bf16.mxu0 0
    %393 = vmatpush2.bf16.msra.mxu0 0
    %394 = vmatprep.subr.bf16.mxu0 0
    %395 = vmatpush2.bf16.msra.mxu0 0
    %396 = vmatprep.subr.bf16.mxu0 0
    %397 = vmatpush2.bf16.msra.mxu0 0
    %398 = vmatprep.subr.bf16.mxu0 0
    %399 = vmatpush2.bf16.msra.mxu0 0
    %400 = vmatprep.subr.bf16.mxu0 0
    %401 = vmatpush2.bf16.msra.mxu0 0
    %402 = vmatprep.subr.bf16.mxu0 0
    %403 = vmatpush2.bf16.msra.mxu0 0
    %404 = vmatprep.subr.bf16.mxu0 0
    %405 = vmatpush2.bf16.msra.mxu0 0
    %406 = vmatprep.mubr.bf16.mxu0 0
    %407 = vmatmul.mubr.bf16.gmra.mxu0 %v245
    %v408 = vpop.f32.mrf.mxu0
    %v409 = vadd.f32 0.0, %v408
    %v410 = vpop.f32.mrf.mxu0
    %v411 = vadd.f32 0.0, %v410
    %v412 = vpop.f32.mrf.mxu0
    %v413 = vpop.f32.mrf.mxu0
    %414 = vdwg.mxu0
    %415 = vmatprep.subr.bf16.mxu0 0
    %416 = vmatpush1.bf16.msra.mxu0 %v349
    %417 = vmatprep.subr.bf16.mxu0 0
    %418 = vmatpush1.bf16.msra.mxu0 %v346
    %419 = vmatprep.subr.bf16.mxu0 0
    %420 = vmatpush1.bf16.msra.mxu0 %v343
    %421 = vmatprep.subr.bf16.mxu0 0
    %422 = vmatpush1.bf16.msra.mxu0 %v340
    %423 = vmatprep.subr.bf16.mxu0 0
    %424 = vmatpush1.bf16.msra.mxu0 %v337
    %425 = vmatprep.subr.bf16.mxu0 0
    %426 = vmatpush1.bf16.msra.mxu0 %v334
    %427 = vmatprep.subr.bf16.mxu0 0
    %428 = vmatpush1.bf16.msra.mxu0 %v331
    %429 = vmatprep.subr.bf16.mxu0 0
    %430 = vmatpush1.bf16.msra.mxu0 %v328
    %431 = vmatprep.subr.bf16.mxu0 0
    %432 = vmatpush2.bf16.msra.mxu0 0
    %433 = vmatprep.subr.bf16.mxu0 0
    %434 = vmatpush2.bf16.msra.mxu0 0
    %435 = vmatprep.subr.bf16.mxu0 0
    %436 = vmatpush2.bf16.msra.mxu0 0
    %437 = vmatprep.subr.bf16.mxu0 0
    %438 = vmatpush2.bf16.msra.mxu0 0
    %439 = vmatprep.subr.bf16.mxu0 0
    %440 = vmatpush2.bf16.msra.mxu0 0
    %441 = vmatprep.subr.bf16.mxu0 0
    %442 = vmatpush2.bf16.msra.mxu0 0
    %443 = vmatprep.subr.bf16.mxu0 0
    %444 = vmatpush2.bf16.msra.mxu0 0
    %445 = vmatprep.subr.bf16.mxu0 0
    %446 = vmatpush2.bf16.msra.mxu0 0
    %447 = vmatprep.mubr.bf16.mxu0 0
    %448 = vmatmul.mubr.bf16.gmra.mxu0 %v245
    %v449 = vpop.f32.mrf.mxu0
    %v450 = vadd.f32 0.0, %v449
    %v451 = vpop.f32.mrf.mxu0
    %v452 = vpop.f32.mrf.mxu0
    %v453 = vpop.f32.mrf.mxu0
    %454 = vdwg.mxu0
    %v455 = vadd.f32 %v199, %v409
    %v456 = vxor.u32 %v455, 2147483648
    %v457 = vmul.f32 %v456, 1.442695
    %v458 = vpow.pop %v457
    %v459 = vadd.f32 %v458, 1.0
    %v460 = vrcp.pop %v459
    %v461 = vmul.f32 1.0, %v460
    %v462 = vadd.f32 %v201, %v411
    %v463 = vxor.u32 %v462, 2147483648
    %v464 = vmul.f32 %v463, 1.442695
    %v465 = vpow.pop %v464
    %v466 = vadd.f32 %v465, 1.0
    %v467 = vrcp.pop %v466
    %v468 = vmul.f32 1.0, %v467
    %v469 = vadd.f32 %v450, %v108
    %v470 = vmul.f32 %v461, %v469
    %v471 = vadd.f32 %v240, %v470
    %v472 = vtanh.pop %v471
    %v473 = vsub.f32 1.0, %v468
    %v474 = vmul.f32 %v473, %v472
    %v475 = vmul.f32 %v468, %v124
    %v476 = vadd.f32 %v474, %v475
    %v477 = vmul.f32 %v476, %v122
    %v478 = vsel %vm151, %v477, 0.0
    %479 = vadd.xlane.f32.xlu0 %v478
    %v480 = vpop.xlane.xlu0 %479
    %v481 = vadd.f32 %v480, %v115
    %vm482 = vcmask 1042434
    %v483 = vsel %vm482, %v128, %v50
    %v486 = vrot.slane %v481, 7
    %487 = vrot.lane.b32.xlu0 %v486, 4
    %v488 = vpop.permute.xlu0 %487
    %v490 = vsel %vm136, %v483, %v488
    %v491 = vpack.c.bf16 %v490, %v490
    %v493 = vshrl.u32 %v491, 16
    %v495 = vshll.u32 %v491, 16
    %v497 = vrot.slane %v495, 1
    %v498 = vor.u32 %v493, %v497
    %v500 = vsel %vm147, %v498, 0
    %502 = vmatprep.subr.bf16.mxu0 0
    %503 = vmatpush1.bf16.msra.mxu0 0
    %504 = vmatprep.subr.bf16.mxu0 0
    %505 = vmatpush1.bf16.msra.mxu0 0
    %506 = vmatprep.subr.bf16.mxu0 0
    %507 = vmatpush1.bf16.msra.mxu0 0
    %508 = vmatprep.subr.bf16.mxu0 0
    %509 = vmatpush1.bf16.msra.mxu0 0
    %510 = vmatprep.subr.bf16.mxu0 0
    %511 = vmatpush1.bf16.msra.mxu0 0
    %512 = vmatprep.subr.bf16.mxu0 0
    %513 = vmatpush1.bf16.msra.mxu0 0
    %514 = vmatprep.subr.bf16.mxu0 0
    %515 = vmatpush1.bf16.msra.mxu0 0
    %516 = vmatprep.subr.bf16.mxu0 %v159
    %517 = vmatpush1.bf16.msra.mxu0 %v156
    %518 = vmatprep.subr.bf16.mxu0 0
    %519 = vmatpush2.bf16.msra.mxu0 0
    %520 = vmatprep.subr.bf16.mxu0 0
    %521 = vmatpush2.bf16.msra.mxu0 0
    %522 = vmatprep.subr.bf16.mxu0 0
    %523 = vmatpush2.bf16.msra.mxu0 0
    %524 = vmatprep.subr.bf16.mxu0 0
    %525 = vmatpush2.bf16.msra.mxu0 0
    %526 = vmatprep.subr.bf16.mxu0 0
    %527 = vmatpush2.bf16.msra.mxu0 0
    %528 = vmatprep.subr.bf16.mxu0 0
    %529 = vmatpush2.bf16.msra.mxu0 0
    %530 = vmatprep.subr.bf16.mxu0 0
    %531 = vmatpush2.bf16.msra.mxu0 0
    %532 = vmatprep.subr.bf16.mxu0 0
    %533 = vmatpush2.bf16.msra.mxu0 0
    %534 = vmatprep.mubr.bf16.mxu0 0
    %535 = vmatmul.mubr.bf16.gmra.mxu0 %v500
    %v536 = vpop.f32.mrf.mxu0
    %v537 = vadd.f32 %v91, %v536
    %v538 = vpop.f32.mrf.mxu0
    %v539 = vadd.f32 %v95, %v538
    %v540 = vpop.f32.mrf.mxu0
    %v541 = vpop.f32.mrf.mxu0
    %542 = vdwg.mxu0
    %543 = vmatprep.subr.bf16.mxu0 0
    %544 = vmatpush1.bf16.msra.mxu0 0
    %545 = vmatprep.subr.bf16.mxu0 0
    %546 = vmatpush1.bf16.msra.mxu0 0
    %547 = vmatprep.subr.bf16.mxu0 0
    %548 = vmatpush1.bf16.msra.mxu0 0
    %549 = vmatprep.subr.bf16.mxu0 0
    %550 = vmatpush1.bf16.msra.mxu0 0
    %551 = vmatprep.subr.bf16.mxu0 0
    %552 = vmatpush1.bf16.msra.mxu0 0
    %553 = vmatprep.subr.bf16.mxu0 0
    %554 = vmatpush1.bf16.msra.mxu0 0
    %555 = vmatprep.subr.bf16.mxu0 0
    %556 = vmatpush1.bf16.msra.mxu0 0
    %557 = vmatprep.subr.bf16.mxu0 0
    %558 = vmatpush1.bf16.msra.mxu0 %v162
    %559 = vmatprep.subr.bf16.mxu0 0
    %560 = vmatpush2.bf16.msra.mxu0 0
    %561 = vmatprep.subr.bf16.mxu0 0
    %562 = vmatpush2.bf16.msra.mxu0 0
    %563 = vmatprep.subr.bf16.mxu0 0
    %564 = vmatpush2.bf16.msra.mxu0 0
    %565 = vmatprep.subr.bf16.mxu0 0
    %566 = vmatpush2.bf16.msra.mxu0 0
    %567 = vmatprep.subr.bf16.mxu0 0
    %568 = vmatpush2.bf16.msra.mxu0 0
    %569 = vmatprep.subr.bf16.mxu0 0
    %570 = vmatpush2.bf16.msra.mxu0 0
    %571 = vmatprep.subr.bf16.mxu0 0
    %572 = vmatpush2.bf16.msra.mxu0 0
    %573 = vmatprep.subr.bf16.mxu0 0
    %574 = vmatpush2.bf16.msra.mxu0 0
    %575 = vmatprep.mubr.bf16.mxu0 0
    %576 = vmatmul.mubr.bf16.gmra.mxu0 %v500
    %v577 = vpop.f32.mrf.mxu0
    %v578 = vadd.f32 %v99, %v577
    %v579 = vpop.f32.mrf.mxu0
    %v580 = vpop.f32.mrf.mxu0
    %v581 = vpop.f32.mrf.mxu0
    %582 = vdwg.mxu0
    %v583 = vpack.c.bf16 %v476, %v476
    %584 = vmatprep.subr.bf16.mxu0 %v348
    %585 = vmatpush1.bf16.msra.mxu0 %v347
    %586 = vmatprep.subr.bf16.mxu0 %v345
    %587 = vmatpush1.bf16.msra.mxu0 %v344
    %588 = vmatprep.subr.bf16.mxu0 %v342
    %589 = vmatpush1.bf16.msra.mxu0 %v341
    %590 = vmatprep.subr.bf16.mxu0 %v339
    %591 = vmatpush1.bf16.msra.mxu0 %v338
    %592 = vmatprep.subr.bf16.mxu0 %v336
    %593 = vmatpush1.bf16.msra.mxu0 %v335
    %594 = vmatprep.subr.bf16.mxu0 %v333
    %595 = vmatpush1.bf16.msra.mxu0 %v332
    %596 = vmatprep.subr.bf16.mxu0 %v330
    %597 = vmatpush1.bf16.msra.mxu0 %v329
    %598 = vmatprep.subr.bf16.mxu0 %v327
    %599 = vmatpush1.bf16.msra.mxu0 %v326
    %600 = vmatprep.subr.bf16.mxu0 0
    %601 = vmatpush2.bf16.msra.mxu0 0
    %602 = vmatprep.subr.bf16.mxu0 0
    %603 = vmatpush2.bf16.msra.mxu0 0
    %604 = vmatprep.subr.bf16.mxu0 0
    %605 = vmatpush2.bf16.msra.mxu0 0
    %606 = vmatprep.subr.bf16.mxu0 0
    %607 = vmatpush2.bf16.msra.mxu0 0
    %608 = vmatprep.subr.bf16.mxu0 0
    %609 = vmatpush2.bf16.msra.mxu0 0
    %610 = vmatprep.subr.bf16.mxu0 0
    %611 = vmatpush2.bf16.msra.mxu0 0
    %612 = vmatprep.subr.bf16.mxu0 0
    %613 = vmatpush2.bf16.msra.mxu0 0
    %614 = vmatprep.subr.bf16.mxu0 0
    %615 = vmatpush2.bf16.msra.mxu0 0
    %616 = vmatprep.mubr.bf16.mxu0 0
    %617 = vmatmul.mubr.bf16.gmra.mxu0 %v583
    %v618 = vpop.f32.mrf.mxu0
    %v619 = vadd.f32 0.0, %v618
    %v620 = vpop.f32.mrf.mxu0
    %v621 = vadd.f32 0.0, %v620
    %v622 = vpop.f32.mrf.mxu0
    %v623 = vpop.f32.mrf.mxu0
    %624 = vdwg.mxu0
    %625 = vmatprep.subr.bf16.mxu0 0
    %626 = vmatpush1.bf16.msra.mxu0 %v349
    %627 = vmatprep.subr.bf16.mxu0 0
    %628 = vmatpush1.bf16.msra.mxu0 %v346
    %629 = vmatprep.subr.bf16.mxu0 0
    %630 = vmatpush1.bf16.msra.mxu0 %v343
    %631 = vmatprep.subr.bf16.mxu0 0
    %632 = vmatpush1.bf16.msra.mxu0 %v340
    %633 = vmatprep.subr.bf16.mxu0 0
    %634 = vmatpush1.bf16.msra.mxu0 %v337
    %635 = vmatprep.subr.bf16.mxu0 0
    %636 = vmatpush1.bf16.msra.mxu0 %v334
    %637 = vmatprep.subr.bf16.mxu0 0
    %638 = vmatpush1.bf16.msra.mxu0 %v331
    %639 = vmatprep.subr.bf16.mxu0 0
    %640 = vmatpush1.bf16.msra.mxu0 %v328
    %641 = vmatprep.subr.bf16.mxu0 0
    %642 = vmatpush2.bf16.msra.mxu0 0
    %643 = vmatprep.subr.bf16.mxu0 0
    %644 = vmatpush2.bf16.msra.mxu0 0
    %645 = vmatprep.subr.bf16.mxu0 0
    %646 = vmatpush2.bf16.msra.mxu0 0
    %647 = vmatprep.subr.bf16.mxu0 0
    %648 = vmatpush2.bf16.msra.mxu0 0
    %649 = vmatprep.subr.bf16.mxu0 0
    %650 = vmatpush2.bf16.msra.mxu0 0
    %651 = vmatprep.subr.bf16.mxu0 0
    %652 = vmatpush2.bf16.msra.mxu0 0
    %653 = vmatprep.subr.bf16.mxu0 0
    %654 = vmatpush2.bf16.msra.mxu0 0
    %655 = vmatprep.subr.bf16.mxu0 0
    %656 = vmatpush2.bf16.msra.mxu0 0
    %657 = vmatprep.mubr.bf16.mxu0 0
    %658 = vmatmul.mubr.bf16.gmra.mxu0 %v583
    %v659 = vpop.f32.mrf.mxu0
    %v660 = vadd.f32 0.0, %v659
    %v661 = vpop.f32.mrf.mxu0
    %v662 = vpop.f32.mrf.mxu0
    %v663 = vpop.f32.mrf.mxu0
    %664 = vdwg.mxu0
    %v665 = vadd.f32 %v537, %v619
    %v666 = vxor.u32 %v665, 2147483648
    %v667 = vmul.f32 %v666, 1.442695
    %v668 = vpow.pop %v667
    %v669 = vadd.f32 %v668, 1.0
    %v670 = vrcp.pop %v669
    %v671 = vmul.f32 1.0, %v670
    %v672 = vadd.f32 %v539, %v621
    %v673 = vxor.u32 %v672, 2147483648
    %v674 = vmul.f32 %v673, 1.442695
    %v675 = vpow.pop %v674
    %v676 = vadd.f32 %v675, 1.0
    %v677 = vrcp.pop %v676
    %v678 = vmul.f32 1.0, %v677
    %v679 = vadd.f32 %v660, %v108
    %v680 = vmul.f32 %v671, %v679
    %v681 = vadd.f32 %v578, %v680
    %v682 = vtanh.pop %v681
    %v683 = vsub.f32 1.0, %v678
    %v684 = vmul.f32 %v683, %v682
    %v685 = vmul.f32 %v678, %v476
    %v686 = vadd.f32 %v684, %v685
    %v687 = vmul.f32 %v686, %v122
    %v688 = vsel %vm151, %v687, 0.0
    %689 = vadd.xlane.f32.xlu0 %v688
    %v690 = vpop.xlane.xlu0 %689
    %v691 = vadd.f32 %v690, %v115
    %vm692 = vcmask 1043459
    %v693 = vsel %vm692, %v128, %v50
    %v696 = vrot.slane %v691, 6
    %697 = vrot.lane.b32.xlu0 %v696, 4
    %v698 = vpop.permute.xlu0 %697
    %v700 = vsel %vm136, %v693, %v698
    %v701 = vpack.c.bf16 %v700, %v700
    %v703 = vrot.slane %v701, 1
    %v705 = vsel %vm147, %v703, 0
    %707 = vmatprep.subr.bf16.mxu0 0
    %708 = vmatpush1.bf16.msra.mxu0 0
    %709 = vmatprep.subr.bf16.mxu0 0
    %710 = vmatpush1.bf16.msra.mxu0 0
    %711 = vmatprep.subr.bf16.mxu0 0
    %712 = vmatpush1.bf16.msra.mxu0 0
    %713 = vmatprep.subr.bf16.mxu0 0
    %714 = vmatpush1.bf16.msra.mxu0 0
    %715 = vmatprep.subr.bf16.mxu0 0
    %716 = vmatpush1.bf16.msra.mxu0 0
    %717 = vmatprep.subr.bf16.mxu0 0
    %718 = vmatpush1.bf16.msra.mxu0 0
    %719 = vmatprep.subr.bf16.mxu0 0
    %720 = vmatpush1.bf16.msra.mxu0 0
    %721 = vmatprep.subr.bf16.mxu0 %v159
    %722 = vmatpush1.bf16.msra.mxu0 %v156
    %723 = vmatprep.subr.bf16.mxu0 0
    %724 = vmatpush2.bf16.msra.mxu0 0
    %725 = vmatprep.subr.bf16.mxu0 0
    %726 = vmatpush2.bf16.msra.mxu0 0
    %727 = vmatprep.subr.bf16.mxu0 0
    %728 = vmatpush2.bf16.msra.mxu0 0
    %729 = vmatprep.subr.bf16.mxu0 0
    %730 = vmatpush2.bf16.msra.mxu0 0
    %731 = vmatprep.subr.bf16.mxu0 0
    %732 = vmatpush2.bf16.msra.mxu0 0
    %733 = vmatprep.subr.bf16.mxu0 0
    %734 = vmatpush2.bf16.msra.mxu0 0
    %735 = vmatprep.subr.bf16.mxu0 0
    %736 = vmatpush2.bf16.msra.mxu0 0
    %737 = vmatprep.subr.bf16.mxu0 0
    %738 = vmatpush2.bf16.msra.mxu0 0
    %739 = vmatprep.mubr.bf16.mxu0 0
    %740 = vmatmul.mubr.bf16.gmra.mxu0 %v705
    %v741 = vpop.f32.mrf.mxu0
    %v742 = vadd.f32 %v91, %v741
    %v743 = vpop.f32.mrf.mxu0
    %v744 = vadd.f32 %v95, %v743
    %v745 = vpop.f32.mrf.mxu0
    %v746 = vpop.f32.mrf.mxu0
    %747 = vdwg.mxu0
    %748 = vmatprep.subr.bf16.mxu0 0
    %749 = vmatpush1.bf16.msra.mxu0 0
    %750 = vmatprep.subr.bf16.mxu0 0
    %751 = vmatpush1.bf16.msra.mxu0 0
    %752 = vmatprep.subr.bf16.mxu0 0
    %753 = vmatpush1.bf16.msra.mxu0 0
    %754 = vmatprep.subr.bf16.mxu0 0
    %755 = vmatpush1.bf16.msra.mxu0 0
    %756 = vmatprep.subr.bf16.mxu0 0
    %757 = vmatpush1.bf16.msra.mxu0 0
    %758 = vmatprep.subr.bf16.mxu0 0
    %759 = vmatpush1.bf16.msra.mxu0 0
    %760 = vmatprep.subr.bf16.mxu0 0
    %761 = vmatpush1.bf16.msra.mxu0 0
    %762 = vmatprep.subr.bf16.mxu0 0
    %763 = vmatpush1.bf16.msra.mxu0 %v162
    %764 = vmatprep.subr.bf16.mxu0 0
    %765 = vmatpush2.bf16.msra.mxu0 0
    %766 = vmatprep.subr.bf16.mxu0 0
    %767 = vmatpush2.bf16.msra.mxu0 0
    %768 = vmatprep.subr.bf16.mxu0 0
    %769 = vmatpush2.bf16.msra.mxu0 0
    %770 = vmatprep.subr.bf16.mxu0 0
    %771 = vmatpush2.bf16.msra.mxu0 0
    %772 = vmatprep.subr.bf16.mxu0 0
    %773 = vmatpush2.bf16.msra.mxu0 0
    %774 = vmatprep.subr.bf16.mxu0 0
    %775 = vmatpush2.bf16.msra.mxu0 0
    %776 = vmatprep.subr.bf16.mxu0 0
    %777 = vmatpush2.bf16.msra.mxu0 0
    %778 = vmatprep.subr.bf16.mxu0 0
    %779 = vmatpush2.bf16.msra.mxu0 0
    %780 = vmatprep.mubr.bf16.mxu0 0
    %781 = vmatmul.mubr.bf16.gmra.mxu0 %v705
    %v782 = vpop.f32.mrf.mxu0
    %v783 = vadd.f32 %v99, %v782
    %v784 = vpop.f32.mrf.mxu0
    %v785 = vpop.f32.mrf.mxu0
    %v786 = vpop.f32.mrf.mxu0
    %787 = vdwg.mxu0
    %v788 = vpack.c.bf16 %v686, %v686
    %789 = vmatprep.subr.bf16.mxu0 %v348
    %790 = vmatpush1.bf16.msra.mxu0 %v347
    %791 = vmatprep.subr.bf16.mxu0 %v345
    %792 = vmatpush1.bf16.msra.mxu0 %v344
    %793 = vmatprep.subr.bf16.mxu0 %v342
    %794 = vmatpush1.bf16.msra.mxu0 %v341
    %795 = vmatprep.subr.bf16.mxu0 %v339
    %796 = vmatpush1.bf16.msra.mxu0 %v338
    %797 = vmatprep.subr.bf16.mxu0 %v336
    %798 = vmatpush1.bf16.msra.mxu0 %v335
    %799 = vmatprep.subr.bf16.mxu0 %v333
    %800 = vmatpush1.bf16.msra.mxu0 %v332
    %801 = vmatprep.subr.bf16.mxu0 %v330
    %802 = vmatpush1.bf16.msra.mxu0 %v329
    %803 = vmatprep.subr.bf16.mxu0 %v327
    %804 = vmatpush1.bf16.msra.mxu0 %v326
    %805 = vmatprep.subr.bf16.mxu0 0
    %806 = vmatpush2.bf16.msra.mxu0 0
    %807 = vmatprep.subr.bf16.mxu0 0
    %808 = vmatpush2.bf16.msra.mxu0 0
    %809 = vmatprep.subr.bf16.mxu0 0
    %810 = vmatpush2.bf16.msra.mxu0 0
    %811 = vmatprep.subr.bf16.mxu0 0
    %812 = vmatpush2.bf16.msra.mxu0 0
    %813 = vmatprep.subr.bf16.mxu0 0
    %814 = vmatpush2.bf16.msra.mxu0 0
    %815 = vmatprep.subr.bf16.mxu0 0
    %816 = vmatpush2.bf16.msra.mxu0 0
    %817 = vmatprep.subr.bf16.mxu0 0
    %818 = vmatpush2.bf16.msra.mxu0 0
    %819 = vmatprep.subr.bf16.mxu0 0
    %820 = vmatpush2.bf16.msra.mxu0 0
    %821 = vmatprep.mubr.bf16.mxu0 0
    %822 = vmatmul.mubr.bf16.gmra.mxu0 %v788
    %v823 = vpop.f32.mrf.mxu0
    %v824 = vadd.f32 0.0, %v823
    %v825 = vpop.f32.mrf.mxu0
    %v826 = vadd.f32 0.0, %v825
    %v827 = vpop.f32.mrf.mxu0
    %v828 = vpop.f32.mrf.mxu0
    %829 = vdwg.mxu0
    %830 = vmatprep.subr.bf16.mxu0 0
    %831 = vmatpush1.bf16.msra.mxu0 %v349
    %832 = vmatprep.subr.bf16.mxu0 0
    %833 = vmatpush1.bf16.msra.mxu0 %v346
    %834 = vmatprep.subr.bf16.mxu0 0
    %835 = vmatpush1.bf16.msra.mxu0 %v343
    %836 = vmatprep.subr.bf16.mxu0 0
    %837 = vmatpush1.bf16.msra.mxu0 %v340
    %838 = vmatprep.subr.bf16.mxu0 0
    %839 = vmatpush1.bf16.msra.mxu0 %v337
    %840 = vmatprep.subr.bf16.mxu0 0
    %841 = vmatpush1.bf16.msra.mxu0 %v334
    %842 = vmatprep.subr.bf16.mxu0 0
    %843 = vmatpush1.bf16.msra.mxu0 %v331
    %844 = vmatprep.subr.bf16.mxu0 0
    %845 = vmatpush1.bf16.msra.mxu0 %v328
    %846 = vmatprep.subr.bf16.mxu0 0
    %847 = vmatpush2.bf16.msra.mxu0 0
    %848 = vmatprep.subr.bf16.mxu0 0
    %849 = vmatpush2.bf16.msra.mxu0 0
    %850 = vmatprep.subr.bf16.mxu0 0
    %851 = vmatpush2.bf16.msra.mxu0 0
    %852 = vmatprep.subr.bf16.mxu0 0
    %853 = vmatpush2.bf16.msra.mxu0 0
    %854 = vmatprep.subr.bf16.mxu0 0
    %855 = vmatpush2.bf16.msra.mxu0 0
    %856 = vmatprep.subr.bf16.mxu0 0
    %857 = vmatpush2.bf16.msra.mxu0 0
    %858 = vmatprep.subr.bf16.mxu0 0
    %859 = vmatpush2.bf16.msra.mxu0 0
    %860 = vmatprep.subr.bf16.mxu0 0
    %861 = vmatpush2.bf16.msra.mxu0 0
    %862 = vmatprep.mubr.bf16.mxu0 0
    %863 = vmatmul.mubr.bf16.gmra.mxu0 %v788
    %v864 = vpop.f32.mrf.mxu0
    %v865 = vadd.f32 0.0, %v864
    %v866 = vpop.f32.mrf.mxu0
    %v867 = vpop.f32.mrf.mxu0
    %v868 = vpop.f32.mrf.mxu0
    %869 = vdwg.mxu0
    %v870 = vadd.f32 %v742, %v824
    %v871 = vxor.u32 %v870, 2147483648
    %v872 = vmul.f32 %v871, 1.442695
    %v873 = vpow.pop %v872
    %v874 = vadd.f32 %v873, 1.0
    %v875 = vrcp.pop %v874
    %v876 = vmul.f32 1.0, %v875
    %v877 = vadd.f32 %v744, %v826
    %v878 = vxor.u32 %v877, 2147483648
    %v879 = vmul.f32 %v878, 1.442695
    %v880 = vpow.pop %v879
    %v881 = vadd.f32 %v880, 1.0
    %v882 = vrcp.pop %v881
    %v883 = vmul.f32 1.0, %v882
    %v884 = vadd.f32 %v865, %v108
    %v885 = vmul.f32 %v876, %v884
    %v886 = vadd.f32 %v783, %v885
    %v887 = vtanh.pop %v886
    %v888 = vsub.f32 1.0, %v883
    %v889 = vmul.f32 %v888, %v887
    %v890 = vmul.f32 %v883, %v686
    %v891 = vadd.f32 %v889, %v890
    %v892 = vmul.f32 %v891, %v122
    %v893 = vsel %vm151, %v892, 0.0
    %894 = vadd.xlane.f32.xlu0 %v893
    %v895 = vpop.xlane.xlu0 %894
    %v896 = vadd.f32 %v895, %v115
    %vm897 = vcmask 1044484
    %v898 = vsel %vm897, %v128, %v50
    %v901 = vrot.slane %v896, 5
    %902 = vrot.lane.b32.xlu0 %v901, 4
    %v903 = vpop.permute.xlu0 %902
    %v905 = vsel %vm136, %v898, %v903
    %v906 = vpack.c.bf16 %v905, %v905
    %v908 = vshrl.u32 %v906, 16
    %v910 = vrot.slane %v908, 1
    %v911 = vshll.u32 %v906, 16
    %v913 = vrot.slane %v911, 2
    %v914 = vor.u32 %v910, %v913
    %v916 = vsel %vm147, %v914, 0
    %918 = vmatprep.subr.bf16.mxu0 0
    %919 = vmatpush1.bf16.msra.mxu0 0
    %920 = vmatprep.subr.bf16.mxu0 0
    %921 = vmatpush1.bf16.msra.mxu0 0
    %922 = vmatprep.subr.bf16.mxu0 0
    %923 = vmatpush1.bf16.msra.mxu0 0
    %924 = vmatprep.subr.bf16.mxu0 0
    %925 = vmatpush1.bf16.msra.mxu0 0
    %926 = vmatprep.subr.bf16.mxu0 0
    %927 = vmatpush1.bf16.msra.mxu0 0
    %928 = vmatprep.subr.bf16.mxu0 0
    %929 = vmatpush1.bf16.msra.mxu0 0
    %930 = vmatprep.subr.bf16.mxu0 0
    %931 = vmatpush1.bf16.msra.mxu0 0
    %932 = vmatprep.subr.bf16.mxu0 %v159
    %933 = vmatpush1.bf16.msra.mxu0 %v156
    %934 = vmatprep.subr.bf16.mxu0 0
    %935 = vmatpush2.bf16.msra.mxu0 0
    %936 = vmatprep.subr.bf16.mxu0 0
    %937 = vmatpush2.bf16.msra.mxu0 0
    %938 = vmatprep.subr.bf16.mxu0 0
    %939 = vmatpush2.bf16.msra.mxu0 0
    %940 = vmatprep.subr.bf16.mxu0 0
    %941 = vmatpush2.bf16.msra.mxu0 0
    %942 = vmatprep.subr.bf16.mxu0 0
    %943 = vmatpush2.bf16.msra.mxu0 0
    %944 = vmatprep.subr.bf16.mxu0 0
    %945 = vmatpush2.bf16.msra.mxu0 0
    %946 = vmatprep.subr.bf16.mxu0 0
    %947 = vmatpush2.bf16.msra.mxu0 0
    %948 = vmatprep.subr.bf16.mxu0 0
    %949 = vmatpush2.bf16.msra.mxu0 0
    %950 = vmatprep.mubr.bf16.mxu0 0
    %951 = vmatmul.mubr.bf16.gmra.mxu0 %v916
    %v952 = vpop.f32.mrf.mxu0
    %v953 = vadd.f32 %v91, %v952
    %v954 = vpop.f32.mrf.mxu0
    %v955 = vadd.f32 %v95, %v954
    %v956 = vpop.f32.mrf.mxu0
    %v957 = vpop.f32.mrf.mxu0
    %958 = vdwg.mxu0
    %959 = vmatprep.subr.bf16.mxu0 0
    %960 = vmatpush1.bf16.msra.mxu0 0
    %961 = vmatprep.subr.bf16.mxu0 0
    %962 = vmatpush1.bf16.msra.mxu0 0
    %963 = vmatprep.subr.bf16.mxu0 0
    %964 = vmatpush1.bf16.msra.mxu0 0
    %965 = vmatprep.subr.bf16.mxu0 0
    %966 = vmatpush1.bf16.msra.mxu0 0
    %967 = vmatprep.subr.bf16.mxu0 0
    %968 = vmatpush1.bf16.msra.mxu0 0
    %969 = vmatprep.subr.bf16.mxu0 0
    %970 = vmatpush1.bf16.msra.mxu0 0
    %971 = vmatprep.subr.bf16.mxu0 0
    %972 = vmatpush1.bf16.msra.mxu0 0
    %973 = vmatprep.subr.bf16.mxu0 0
    %974 = vmatpush1.bf16.msra.mxu0 %v162
    %975 = vmatprep.subr.bf16.mxu0 0
    %976 = vmatpush2.bf16.msra.mxu0 0
    %977 = vmatprep.subr.bf16.mxu0 0
    %978 = vmatpush2.bf16.msra.mxu0 0
    %979 = vmatprep.subr.bf16.mxu0 0
    %980 = vmatpush2.bf16.msra.mxu0 0
    %981 = vmatprep.subr.bf16.mxu0 0
    %982 = vmatpush2.bf16.msra.mxu0 0
    %983 = vmatprep.subr.bf16.mxu0 0
    %984 = vmatpush2.bf16.msra.mxu0 0
    %985 = vmatprep.subr.bf16.mxu0 0
    %986 = vmatpush2.bf16.msra.mxu0 0
    %987 = vmatprep.subr.bf16.mxu0 0
    %988 = vmatpush2.bf16.msra.mxu0 0
    %989 = vmatprep.subr.bf16.mxu0 0
    %990 = vmatpush2.bf16.msra.mxu0 0
    %991 = vmatprep.mubr.bf16.mxu0 0
    %992 = vmatmul.mubr.bf16.gmra.mxu0 %v916
    %v993 = vpop.f32.mrf.mxu0
    %v994 = vadd.f32 %v99, %v993
    %v995 = vpop.f32.mrf.mxu0
    %v996 = vpop.f32.mrf.mxu0
    %v997 = vpop.f32.mrf.mxu0
    %998 = vdwg.mxu0
    %v999 = vpack.c.bf16 %v891, %v891
    %1000 = vmatprep.subr.bf16.mxu0 %v348
    %1001 = vmatpush1.bf16.msra.mxu0 %v347
    %1002 = vmatprep.subr.bf16.mxu0 %v345
    %1003 = vmatpush1.bf16.msra.mxu0 %v344
    %1004 = vmatprep.subr.bf16.mxu0 %v342
    %1005 = vmatpush1.bf16.msra.mxu0 %v341
    %1006 = vmatprep.subr.bf16.mxu0 %v339
    %1007 = vmatpush1.bf16.msra.mxu0 %v338
    %1008 = vmatprep.subr.bf16.mxu0 %v336
    %1009 = vmatpush1.bf16.msra.mxu0 %v335
    %1010 = vmatprep.subr.bf16.mxu0 %v333
    %1011 = vmatpush1.bf16.msra.mxu0 %v332
    %1012 = vmatprep.subr.bf16.mxu0 %v330
    %1013 = vmatpush1.bf16.msra.mxu0 %v329
    %1014 = vmatprep.subr.bf16.mxu0 %v327
    %1015 = vmatpush1.bf16.msra.mxu0 %v326
    %1016 = vmatprep.subr.bf16.mxu0 0
    %1017 = vmatpush2.bf16.msra.mxu0 0
    %1018 = vmatprep.subr.bf16.mxu0 0
    %1019 = vmatpush2.bf16.msra.mxu0 0
    %1020 = vmatprep.subr.bf16.mxu0 0
    %1021 = vmatpush2.bf16.msra.mxu0 0
    %1022 = vmatprep.subr.bf16.mxu0 0
    %1023 = vmatpush2.bf16.msra.mxu0 0
    %1024 = vmatprep.subr.bf16.mxu0 0
    %1025 = vmatpush2.bf16.msra.mxu0 0
    %1026 = vmatprep.subr.bf16.mxu0 0
    %1027 = vmatpush2.bf16.msra.mxu0 0
    %1028 = vmatprep.subr.bf16.mxu0 0
    %1029 = vmatpush2.bf16.msra.mxu0 0
    %1030 = vmatprep.subr.bf16.mxu0 0
    %1031 = vmatpush2.bf16.msra.mxu0 0
    %1032 = vmatprep.mubr.bf16.mxu0 0
    %1033 = vmatmul.mubr.bf16.gmra.mxu0 %v999
    %v1034 = vpop.f32.mrf.mxu0
    %v1035 = vadd.f32 0.0, %v1034
    %v1036 = vpop.f32.mrf.mxu0
    %v1037 = vadd.f32 0.0, %v1036
    %v1038 = vpop.f32.mrf.mxu0
    %v1039 = vpop.f32.mrf.mxu0
    %1040 = vdwg.mxu0
    %1041 = vmatprep.subr.bf16.mxu0 0
    %1042 = vmatpush1.bf16.msra.mxu0 %v349
    %1043 = vmatprep.subr.bf16.mxu0 0
    %1044 = vmatpush1.bf16.msra.mxu0 %v346
    %1045 = vmatprep.subr.bf16.mxu0 0
    %1046 = vmatpush1.bf16.msra.mxu0 %v343
    %1047 = vmatprep.subr.bf16.mxu0 0
    %1048 = vmatpush1.bf16.msra.mxu0 %v340
    %1049 = vmatprep.subr.bf16.mxu0 0
    %1050 = vmatpush1.bf16.msra.mxu0 %v337
    %1051 = vmatprep.subr.bf16.mxu0 0
    %1052 = vmatpush1.bf16.msra.mxu0 %v334
    %1053 = vmatprep.subr.bf16.mxu0 0
    %1054 = vmatpush1.bf16.msra.mxu0 %v331
    %1055 = vmatprep.subr.bf16.mxu0 0
    %1056 = vmatpush1.bf16.msra.mxu0 %v328
    %1057 = vmatprep.subr.bf16.mxu0 0
    %1058 = vmatpush2.bf16.msra.mxu0 0
    %1059 = vmatprep.subr.bf16.mxu0 0
    %1060 = vmatpush2.bf16.msra.mxu0 0
    %1061 = vmatprep.subr.bf16.mxu0 0
    %1062 = vmatpush2.bf16.msra.mxu0 0
    %1063 = vmatprep.subr.bf16.mxu0 0
    %1064 = vmatpush2.bf16.msra.mxu0 0
    %1065 = vmatprep.subr.bf16.mxu0 0
    %1066 = vmatpush2.bf16.msra.mxu0 0
    %1067 = vmatprep.subr.bf16.mxu0 0
    %1068 = vmatpush2.bf16.msra.mxu0 0
    %1069 = vmatprep.subr.bf16.mxu0 0
    %1070 = vmatpush2.bf16.msra.mxu0 0
    %1071 = vmatprep.subr.bf16.mxu0 0
    %1072 = vmatpush2.bf16.msra.mxu0 0
    %1073 = vmatprep.mubr.bf16.mxu0 0
    %1074 = vmatmul.mubr.bf16.gmra.mxu0 %v999
    %v1075 = vpop.f32.mrf.mxu0
    %v1076 = vadd.f32 0.0, %v1075
    %v1077 = vpop.f32.mrf.mxu0
    %v1078 = vpop.f32.mrf.mxu0
    %v1079 = vpop.f32.mrf.mxu0
    %1080 = vdwg.mxu0
    %v1081 = vadd.f32 %v953, %v1035
    %v1082 = vxor.u32 %v1081, 2147483648
    %v1083 = vmul.f32 %v1082, 1.442695
    %v1084 = vpow.pop %v1083
    %v1085 = vadd.f32 %v1084, 1.0
    %v1086 = vrcp.pop %v1085
    %v1087 = vmul.f32 1.0, %v1086
    %v1088 = vadd.f32 %v955, %v1037
    %v1089 = vxor.u32 %v1088, 2147483648
    %v1090 = vmul.f32 %v1089, 1.442695
    %v1091 = vpow.pop %v1090
    %v1092 = vadd.f32 %v1091, 1.0
    %v1093 = vrcp.pop %v1092
    %v1094 = vmul.f32 1.0, %v1093
    %v1095 = vadd.f32 %v1076, %v108
    %v1096 = vmul.f32 %v1087, %v1095
    %v1097 = vadd.f32 %v994, %v1096
    %v1098 = vtanh.pop %v1097
    %v1099 = vsub.f32 1.0, %v1094
    %v1100 = vmul.f32 %v1099, %v1098
    %v1101 = vmul.f32 %v1094, %v891
    %v1102 = vadd.f32 %v1100, %v1101
    %v1103 = vmul.f32 %v1102, %v122
    %v1104 = vsel %vm151, %v1103, 0.0
    %1105 = vadd.xlane.f32.xlu0 %v1104
    %v1106 = vpop.xlane.xlu0 %1105
    %v1107 = vadd.f32 %v1106, %v115
    %vm1108 = vcmask 1045509
    %v1109 = vsel %vm1108, %v128, %v50
    %v1112 = vrot.slane %v1107, 4
    %1113 = vrot.lane.b32.xlu0 %v1112, 4
    %v1114 = vpop.permute.xlu0 %1113
    %v1116 = vsel %vm136, %v1109, %v1114
    %v1117 = vpack.c.bf16 %v1116, %v1116
    %v1119 = vrot.slane %v1117, 2
    %v1121 = vsel %vm147, %v1119, 0
    %1123 = vmatprep.subr.bf16.mxu0 0
    %1124 = vmatpush1.bf16.msra.mxu0 0
    %1125 = vmatprep.subr.bf16.mxu0 0
    %1126 = vmatpush1.bf16.msra.mxu0 0
    %1127 = vmatprep.subr.bf16.mxu0 0
    %1128 = vmatpush1.bf16.msra.mxu0 0
    %1129 = vmatprep.subr.bf16.mxu0 0
    %1130 = vmatpush1.bf16.msra.mxu0 0
    %1131 = vmatprep.subr.bf16.mxu0 0
    %1132 = vmatpush1.bf16.msra.mxu0 0
    %1133 = vmatprep.subr.bf16.mxu0 0
    %1134 = vmatpush1.bf16.msra.mxu0 0
    %1135 = vmatprep.subr.bf16.mxu0 0
    %1136 = vmatpush1.bf16.msra.mxu0 0
    %1137 = vmatprep.subr.bf16.mxu0 %v159
    %1138 = vmatpush1.bf16.msra.mxu0 %v156
    %1139 = vmatprep.subr.bf16.mxu0 0
    %1140 = vmatpush2.bf16.msra.mxu0 0
    %1141 = vmatprep.subr.bf16.mxu0 0
    %1142 = vmatpush2.bf16.msra.mxu0 0
    %1143 = vmatprep.subr.bf16.mxu0 0
    %1144 = vmatpush2.bf16.msra.mxu0 0
    %1145 = vmatprep.subr.bf16.mxu0 0
    %1146 = vmatpush2.bf16.msra.mxu0 0
    %1147 = vmatprep.subr.bf16.mxu0 0
    %1148 = vmatpush2.bf16.msra.mxu0 0
    %1149 = vmatprep.subr.bf16.mxu0 0
    %1150 = vmatpush2.bf16.msra.mxu0 0
    %1151 = vmatprep.subr.bf16.mxu0 0
    %1152 = vmatpush2.bf16.msra.mxu0 0
    %1153 = vmatprep.subr.bf16.mxu0 0
    %1154 = vmatpush2.bf16.msra.mxu0 0
    %1155 = vmatprep.mubr.bf16.mxu0 0
    %1156 = vmatmul.mubr.bf16.gmra.mxu0 %v1121
    %v1157 = vpop.f32.mrf.mxu0
    %v1158 = vadd.f32 %v91, %v1157
    %v1159 = vpop.f32.mrf.mxu0
    %v1160 = vadd.f32 %v95, %v1159
    %v1161 = vpop.f32.mrf.mxu0
    %v1162 = vpop.f32.mrf.mxu0
    %1163 = vdwg.mxu0
    %1164 = vmatprep.subr.bf16.mxu0 0
    %1165 = vmatpush1.bf16.msra.mxu0 0
    %1166 = vmatprep.subr.bf16.mxu0 0
    %1167 = vmatpush1.bf16.msra.mxu0 0
    %1168 = vmatprep.subr.bf16.mxu0 0
    %1169 = vmatpush1.bf16.msra.mxu0 0
    %1170 = vmatprep.subr.bf16.mxu0 0
    %1171 = vmatpush1.bf16.msra.mxu0 0
    %1172 = vmatprep.subr.bf16.mxu0 0
    %1173 = vmatpush1.bf16.msra.mxu0 0
    %1174 = vmatprep.subr.bf16.mxu0 0
    %1175 = vmatpush1.bf16.msra.mxu0 0
    %1176 = vmatprep.subr.bf16.mxu0 0
    %1177 = vmatpush1.bf16.msra.mxu0 0
    %1178 = vmatprep.subr.bf16.mxu0 0
    %1179 = vmatpush1.bf16.msra.mxu0 %v162
    %1180 = vmatprep.subr.bf16.mxu0 0
    %1181 = vmatpush2.bf16.msra.mxu0 0
    %1182 = vmatprep.subr.bf16.mxu0 0
    %1183 = vmatpush2.bf16.msra.mxu0 0
    %1184 = vmatprep.subr.bf16.mxu0 0
    %1185 = vmatpush2.bf16.msra.mxu0 0
    %1186 = vmatprep.subr.bf16.mxu0 0
    %1187 = vmatpush2.bf16.msra.mxu0 0
    %1188 = vmatprep.subr.bf16.mxu0 0
    %1189 = vmatpush2.bf16.msra.mxu0 0
    %1190 = vmatprep.subr.bf16.mxu0 0
    %1191 = vmatpush2.bf16.msra.mxu0 0
    %1192 = vmatprep.subr.bf16.mxu0 0
    %1193 = vmatpush2.bf16.msra.mxu0 0
    %1194 = vmatprep.subr.bf16.mxu0 0
    %1195 = vmatpush2.bf16.msra.mxu0 0
    %1196 = vmatprep.mubr.bf16.mxu0 0
    %1197 = vmatmul.mubr.bf16.gmra.mxu0 %v1121
    %v1198 = vpop.f32.mrf.mxu0
    %v1199 = vadd.f32 %v99, %v1198
    %v1200 = vpop.f32.mrf.mxu0
    %v1201 = vpop.f32.mrf.mxu0
    %v1202 = vpop.f32.mrf.mxu0
    %1203 = vdwg.mxu0
    %v1204 = vpack.c.bf16 %v1102, %v1102
    %1205 = vmatprep.subr.bf16.mxu0 %v348
    %1206 = vmatpush1.bf16.msra.mxu0 %v347
    %1207 = vmatprep.subr.bf16.mxu0 %v345
    %1208 = vmatpush1.bf16.msra.mxu0 %v344
    %1209 = vmatprep.subr.bf16.mxu0 %v342
    %1210 = vmatpush1.bf16.msra.mxu0 %v341
    %1211 = vmatprep.subr.bf16.mxu0 %v339
    %1212 = vmatpush1.bf16.msra.mxu0 %v338
    %1213 = vmatprep.subr.bf16.mxu0 %v336
    %1214 = vmatpush1.bf16.msra.mxu0 %v335
    %1215 = vmatprep.subr.bf16.mxu0 %v333
    %1216 = vmatpush1.bf16.msra.mxu0 %v332
    %1217 = vmatprep.subr.bf16.mxu0 %v330
    %1218 = vmatpush1.bf16.msra.mxu0 %v329
    %1219 = vmatprep.subr.bf16.mxu0 %v327
    %1220 = vmatpush1.bf16.msra.mxu0 %v326
    %1221 = vmatprep.subr.bf16.mxu0 0
    %1222 = vmatpush2.bf16.msra.mxu0 0
    %1223 = vmatprep.subr.bf16.mxu0 0
    %1224 = vmatpush2.bf16.msra.mxu0 0
    %1225 = vmatprep.subr.bf16.mxu0 0
    %1226 = vmatpush2.bf16.msra.mxu0 0
    %1227 = vmatprep.subr.bf16.mxu0 0
    %1228 = vmatpush2.bf16.msra.mxu0 0
    %1229 = vmatprep.subr.bf16.mxu0 0
    %1230 = vmatpush2.bf16.msra.mxu0 0
    %1231 = vmatprep.subr.bf16.mxu0 0
    %1232 = vmatpush2.bf16.msra.mxu0 0
    %1233 = vmatprep.subr.bf16.mxu0 0
    %1234 = vmatpush2.bf16.msra.mxu0 0
    %1235 = vmatprep.subr.bf16.mxu0 0
    %1236 = vmatpush2.bf16.msra.mxu0 0
    %1237 = vmatprep.mubr.bf16.mxu0 0
    %1238 = vmatmul.mubr.bf16.gmra.mxu0 %v1204
    %v1239 = vpop.f32.mrf.mxu0
    %v1240 = vadd.f32 0.0, %v1239
    %v1241 = vpop.f32.mrf.mxu0
    %v1242 = vadd.f32 0.0, %v1241
    %v1243 = vpop.f32.mrf.mxu0
    %v1244 = vpop.f32.mrf.mxu0
    %1245 = vdwg.mxu0
    %1246 = vmatprep.subr.bf16.mxu0 0
    %1247 = vmatpush1.bf16.msra.mxu0 %v349
    %1248 = vmatprep.subr.bf16.mxu0 0
    %1249 = vmatpush1.bf16.msra.mxu0 %v346
    %1250 = vmatprep.subr.bf16.mxu0 0
    %1251 = vmatpush1.bf16.msra.mxu0 %v343
    %1252 = vmatprep.subr.bf16.mxu0 0
    %1253 = vmatpush1.bf16.msra.mxu0 %v340
    %1254 = vmatprep.subr.bf16.mxu0 0
    %1255 = vmatpush1.bf16.msra.mxu0 %v337
    %1256 = vmatprep.subr.bf16.mxu0 0
    %1257 = vmatpush1.bf16.msra.mxu0 %v334
    %1258 = vmatprep.subr.bf16.mxu0 0
    %1259 = vmatpush1.bf16.msra.mxu0 %v331
    %1260 = vmatprep.subr.bf16.mxu0 0
    %1261 = vmatpush1.bf16.msra.mxu0 %v328
    %1262 = vmatprep.subr.bf16.mxu0 0
    %1263 = vmatpush2.bf16.msra.mxu0 0
    %1264 = vmatprep.subr.bf16.mxu0 0
    %1265 = vmatpush2.bf16.msra.mxu0 0
    %1266 = vmatprep.subr.bf16.mxu0 0
    %1267 = vmatpush2.bf16.msra.mxu0 0
    %1268 = vmatprep.subr.bf16.mxu0 0
    %1269 = vmatpush2.bf16.msra.mxu0 0
    %1270 = vmatprep.subr.bf16.mxu0 0
    %1271 = vmatpush2.bf16.msra.mxu0 0
    %1272 = vmatprep.subr.bf16.mxu0 0
    %1273 = vmatpush2.bf16.msra.mxu0 0
    %1274 = vmatprep.subr.bf16.mxu0 0
    %1275 = vmatpush2.bf16.msra.mxu0 0
    %1276 = vmatprep.subr.bf16.mxu0 0
    %1277 = vmatpush2.bf16.msra.mxu0 0
    %1278 = vmatprep.mubr.bf16.mxu0 0
    %1279 = vmatmul.mubr.bf16.gmra.mxu0 %v1204
    %v1280 = vpop.f32.mrf.mxu0
    %v1281 = vadd.f32 0.0, %v1280
    %v1282 = vpop.f32.mrf.mxu0
    %v1283 = vpop.f32.mrf.mxu0
    %v1284 = vpop.f32.mrf.mxu0
    %1285 = vdwg.mxu0
    %v1286 = vadd.f32 %v1158, %v1240
    %v1287 = vxor.u32 %v1286, 2147483648
    %v1288 = vmul.f32 %v1287, 1.442695
    %v1289 = vpow.pop %v1288
    %v1290 = vadd.f32 %v1289, 1.0
    %v1291 = vrcp.pop %v1290
    %v1292 = vmul.f32 1.0, %v1291
    %v1293 = vadd.f32 %v1160, %v1242
    %v1294 = vxor.u32 %v1293, 2147483648
    %v1295 = vmul.f32 %v1294, 1.442695
    %v1296 = vpow.pop %v1295
    %v1297 = vadd.f32 %v1296, 1.0
    %v1298 = vrcp.pop %v1297
    %v1299 = vmul.f32 1.0, %v1298
    %v1300 = vadd.f32 %v1281, %v108
    %v1301 = vmul.f32 %v1292, %v1300
    %v1302 = vadd.f32 %v1199, %v1301
    %v1303 = vtanh.pop %v1302
    %v1304 = vsub.f32 1.0, %v1299
    %v1305 = vmul.f32 %v1304, %v1303
    %v1306 = vmul.f32 %v1299, %v1102
    %v1307 = vadd.f32 %v1305, %v1306
    %v1308 = vmul.f32 %v1307, %v122
    %v1309 = vsel %vm151, %v1308, 0.0
    %1310 = vadd.xlane.f32.xlu0 %v1309
    %v1311 = vpop.xlane.xlu0 %1310
    %v1312 = vadd.f32 %v1311, %v115
    %vm1313 = vcmask 1046534
    %v1314 = vsel %vm1313, %v128, %v50
    %v1317 = vrot.slane %v1312, 3
    %1318 = vrot.lane.b32.xlu0 %v1317, 4
    %v1319 = vpop.permute.xlu0 %1318
    %v1321 = vsel %vm136, %v1314, %v1319
    %v1322 = vpack.c.bf16 %v1321, %v1321
    %v1324 = vshrl.u32 %v1322, 16
    %v1326 = vrot.slane %v1324, 2
    %v1327 = vshll.u32 %v1322, 16
    %v1329 = vrot.slane %v1327, 3
    %v1330 = vor.u32 %v1326, %v1329
    %v1332 = vsel %vm147, %v1330, 0
    %1334 = vmatprep.subr.bf16.mxu0 0
    %1335 = vmatpush1.bf16.msra.mxu0 0
    %1336 = vmatprep.subr.bf16.mxu0 0
    %1337 = vmatpush1.bf16.msra.mxu0 0
    %1338 = vmatprep.subr.bf16.mxu0 0
    %1339 = vmatpush1.bf16.msra.mxu0 0
    %1340 = vmatprep.subr.bf16.mxu0 0
    %1341 = vmatpush1.bf16.msra.mxu0 0
    %1342 = vmatprep.subr.bf16.mxu0 0
    %1343 = vmatpush1.bf16.msra.mxu0 0
    %1344 = vmatprep.subr.bf16.mxu0 0
    %1345 = vmatpush1.bf16.msra.mxu0 0
    %1346 = vmatprep.subr.bf16.mxu0 0
    %1347 = vmatpush1.bf16.msra.mxu0 0
    %1348 = vmatprep.subr.bf16.mxu0 %v159
    %1349 = vmatpush1.bf16.msra.mxu0 %v156
    %1350 = vmatprep.subr.bf16.mxu0 0
    %1351 = vmatpush2.bf16.msra.mxu0 0
    %1352 = vmatprep.subr.bf16.mxu0 0
    %1353 = vmatpush2.bf16.msra.mxu0 0
    %1354 = vmatprep.subr.bf16.mxu0 0
    %1355 = vmatpush2.bf16.msra.mxu0 0
    %1356 = vmatprep.subr.bf16.mxu0 0
    %1357 = vmatpush2.bf16.msra.mxu0 0
    %1358 = vmatprep.subr.bf16.mxu0 0
    %1359 = vmatpush2.bf16.msra.mxu0 0
    %1360 = vmatprep.subr.bf16.mxu0 0
    %1361 = vmatpush2.bf16.msra.mxu0 0
    %1362 = vmatprep.subr.bf16.mxu0 0
    %1363 = vmatpush2.bf16.msra.mxu0 0
    %1364 = vmatprep.subr.bf16.mxu0 0
    %1365 = vmatpush2.bf16.msra.mxu0 0
    %1366 = vmatprep.mubr.bf16.mxu0 0
    %1367 = vmatmul.mubr.bf16.gmra.mxu0 %v1332
    %v1368 = vpop.f32.mrf.mxu0
    %v1369 = vadd.f32 %v91, %v1368
    %v1370 = vpop.f32.mrf.mxu0
    %v1371 = vadd.f32 %v95, %v1370
    %v1372 = vpop.f32.mrf.mxu0
    %v1373 = vpop.f32.mrf.mxu0
    %1374 = vdwg.mxu0
    %1375 = vmatprep.subr.bf16.mxu0 0
    %1376 = vmatpush1.bf16.msra.mxu0 0
    %1377 = vmatprep.subr.bf16.mxu0 0
    %1378 = vmatpush1.bf16.msra.mxu0 0
    %1379 = vmatprep.subr.bf16.mxu0 0
    %1380 = vmatpush1.bf16.msra.mxu0 0
    %1381 = vmatprep.subr.bf16.mxu0 0
    %1382 = vmatpush1.bf16.msra.mxu0 0
    %1383 = vmatprep.subr.bf16.mxu0 0
    %1384 = vmatpush1.bf16.msra.mxu0 0
    %1385 = vmatprep.subr.bf16.mxu0 0
    %1386 = vmatpush1.bf16.msra.mxu0 0
    %1387 = vmatprep.subr.bf16.mxu0 0
    %1388 = vmatpush1.bf16.msra.mxu0 0
    %1389 = vmatprep.subr.bf16.mxu0 0
    %1390 = vmatpush1.bf16.msra.mxu0 %v162
    %1391 = vmatprep.subr.bf16.mxu0 0
    %1392 = vmatpush2.bf16.msra.mxu0 0
    %1393 = vmatprep.subr.bf16.mxu0 0
    %1394 = vmatpush2.bf16.msra.mxu0 0
    %1395 = vmatprep.subr.bf16.mxu0 0
    %1396 = vmatpush2.bf16.msra.mxu0 0
    %1397 = vmatprep.subr.bf16.mxu0 0
    %1398 = vmatpush2.bf16.msra.mxu0 0
    %1399 = vmatprep.subr.bf16.mxu0 0
    %1400 = vmatpush2.bf16.msra.mxu0 0
    %1401 = vmatprep.subr.bf16.mxu0 0
    %1402 = vmatpush2.bf16.msra.mxu0 0
    %1403 = vmatprep.subr.bf16.mxu0 0
    %1404 = vmatpush2.bf16.msra.mxu0 0
    %1405 = vmatprep.subr.bf16.mxu0 0
    %1406 = vmatpush2.bf16.msra.mxu0 0
    %1407 = vmatprep.mubr.bf16.mxu0 0
    %1408 = vmatmul.mubr.bf16.gmra.mxu0 %v1332
    %v1409 = vpop.f32.mrf.mxu0
    %v1410 = vadd.f32 %v99, %v1409
    %v1411 = vpop.f32.mrf.mxu0
    %v1412 = vpop.f32.mrf.mxu0
    %v1413 = vpop.f32.mrf.mxu0
    %1414 = vdwg.mxu0
    %v1415 = vpack.c.bf16 %v1307, %v1307
    %1416 = vmatprep.subr.bf16.mxu0 %v348
    %1417 = vmatpush1.bf16.msra.mxu0 %v347
    %1418 = vmatprep.subr.bf16.mxu0 %v345
    %1419 = vmatpush1.bf16.msra.mxu0 %v344
    %1420 = vmatprep.subr.bf16.mxu0 %v342
    %1421 = vmatpush1.bf16.msra.mxu0 %v341
    %1422 = vmatprep.subr.bf16.mxu0 %v339
    %1423 = vmatpush1.bf16.msra.mxu0 %v338
    %1424 = vmatprep.subr.bf16.mxu0 %v336
    %1425 = vmatpush1.bf16.msra.mxu0 %v335
    %1426 = vmatprep.subr.bf16.mxu0 %v333
    %1427 = vmatpush1.bf16.msra.mxu0 %v332
    %1428 = vmatprep.subr.bf16.mxu0 %v330
    %1429 = vmatpush1.bf16.msra.mxu0 %v329
    %1430 = vmatprep.subr.bf16.mxu0 %v327
    %1431 = vmatpush1.bf16.msra.mxu0 %v326
    %1432 = vmatprep.subr.bf16.mxu0 0
    %1433 = vmatpush2.bf16.msra.mxu0 0
    %1434 = vmatprep.subr.bf16.mxu0 0
    %1435 = vmatpush2.bf16.msra.mxu0 0
    %1436 = vmatprep.subr.bf16.mxu0 0
    %1437 = vmatpush2.bf16.msra.mxu0 0
    %1438 = vmatprep.subr.bf16.mxu0 0
    %1439 = vmatpush2.bf16.msra.mxu0 0
    %1440 = vmatprep.subr.bf16.mxu0 0
    %1441 = vmatpush2.bf16.msra.mxu0 0
    %1442 = vmatprep.subr.bf16.mxu0 0
    %1443 = vmatpush2.bf16.msra.mxu0 0
    %1444 = vmatprep.subr.bf16.mxu0 0
    %1445 = vmatpush2.bf16.msra.mxu0 0
    %1446 = vmatprep.subr.bf16.mxu0 0
    %1447 = vmatpush2.bf16.msra.mxu0 0
    %1448 = vmatprep.mubr.bf16.mxu0 0
    %1449 = vmatmul.mubr.bf16.gmra.mxu0 %v1415
    %v1450 = vpop.f32.mrf.mxu0
    %v1451 = vadd.f32 0.0, %v1450
    %v1452 = vpop.f32.mrf.mxu0
    %v1453 = vadd.f32 0.0, %v1452
    %v1454 = vpop.f32.mrf.mxu0
    %v1455 = vpop.f32.mrf.mxu0
    %1456 = vdwg.mxu0
    %1457 = vmatprep.subr.bf16.mxu0 0
    %1458 = vmatpush1.bf16.msra.mxu0 %v349
    %1459 = vmatprep.subr.bf16.mxu0 0
    %1460 = vmatpush1.bf16.msra.mxu0 %v346
    %1461 = vmatprep.subr.bf16.mxu0 0
    %1462 = vmatpush1.bf16.msra.mxu0 %v343
    %1463 = vmatprep.subr.bf16.mxu0 0
    %1464 = vmatpush1.bf16.msra.mxu0 %v340
    %1465 = vmatprep.subr.bf16.mxu0 0
    %1466 = vmatpush1.bf16.msra.mxu0 %v337
    %1467 = vmatprep.subr.bf16.mxu0 0
    %1468 = vmatpush1.bf16.msra.mxu0 %v334
    %1469 = vmatprep.subr.bf16.mxu0 0
    %1470 = vmatpush1.bf16.msra.mxu0 %v331
    %1471 = vmatprep.subr.bf16.mxu0 0
    %1472 = vmatpush1.bf16.msra.mxu0 %v328
    %1473 = vmatprep.subr.bf16.mxu0 0
    %1474 = vmatpush2.bf16.msra.mxu0 0
    %1475 = vmatprep.subr.bf16.mxu0 0
    %1476 = vmatpush2.bf16.msra.mxu0 0
    %1477 = vmatprep.subr.bf16.mxu0 0
    %1478 = vmatpush2.bf16.msra.mxu0 0
    %1479 = vmatprep.subr.bf16.mxu0 0
    %1480 = vmatpush2.bf16.msra.mxu0 0
    %1481 = vmatprep.subr.bf16.mxu0 0
    %1482 = vmatpush2.bf16.msra.mxu0 0
    %1483 = vmatprep.subr.bf16.mxu0 0
    %1484 = vmatpush2.bf16.msra.mxu0 0
    %1485 = vmatprep.subr.bf16.mxu0 0
    %1486 = vmatpush2.bf16.msra.mxu0 0
    %1487 = vmatprep.subr.bf16.mxu0 0
    %1488 = vmatpush2.bf16.msra.mxu0 0
    %1489 = vmatprep.mubr.bf16.mxu0 0
    %1490 = vmatmul.mubr.bf16.gmra.mxu0 %v1415
    %v1491 = vpop.f32.mrf.mxu0
    %v1492 = vadd.f32 0.0, %v1491
    %v1493 = vpop.f32.mrf.mxu0
    %v1494 = vpop.f32.mrf.mxu0
    %v1495 = vpop.f32.mrf.mxu0
    %1496 = vdwg.mxu0
    %v1497 = vadd.f32 %v1369, %v1451
    %v1498 = vxor.u32 %v1497, 2147483648
    %v1499 = vmul.f32 %v1498, 1.442695
    %v1500 = vpow.pop %v1499
    %v1501 = vadd.f32 %v1500, 1.0
    %v1502 = vrcp.pop %v1501
    %v1503 = vmul.f32 1.0, %v1502
    %v1504 = vadd.f32 %v1371, %v1453
    %v1505 = vxor.u32 %v1504, 2147483648
    %v1506 = vmul.f32 %v1505, 1.442695
    %v1507 = vpow.pop %v1506
    %v1508 = vadd.f32 %v1507, 1.0
    %v1509 = vrcp.pop %v1508
    %v1510 = vmul.f32 1.0, %v1509
    %v1511 = vadd.f32 %v1492, %v108
    %v1512 = vmul.f32 %v1503, %v1511
    %v1513 = vadd.f32 %v1410, %v1512
    %v1514 = vtanh.pop %v1513
    %v1515 = vsub.f32 1.0, %v1510
    %v1516 = vmul.f32 %v1515, %v1514
    %v1517 = vmul.f32 %v1510, %v1307
    %v1518 = vadd.f32 %v1516, %v1517
    %v1519 = vmul.f32 %v1518, %v122
    %v1520 = vsel %vm151, %v1519, 0.0
    %1521 = vadd.xlane.f32.xlu0 %v1520
    %v1522 = vpop.xlane.xlu0 %1521
    %v1523 = vadd.f32 %v1522, %v115
    %vm1524 = vcmask 1047559
    %v1525 = vsel %vm1524, %v128, %v50
    %v1528 = vrot.slane %v1523, 2
    %1529 = vrot.lane.b32.xlu0 %v1528, 4
    %v1530 = vpop.permute.xlu0 %1529
    %v1532 = vsel %vm136, %v1525, %v1530
    %v1533 = vpack.c.bf16 %v1532, %v1532
    %v1535 = vrot.slane %v1533, 3
    %v1537 = vsel %vm147, %v1535, 0
    %1539 = vmatprep.subr.bf16.mxu0 0
    %1540 = vmatpush1.bf16.msra.mxu0 0
    %1541 = vmatprep.subr.bf16.mxu0 0
    %1542 = vmatpush1.bf16.msra.mxu0 0
    %1543 = vmatprep.subr.bf16.mxu0 0
    %1544 = vmatpush1.bf16.msra.mxu0 0
    %1545 = vmatprep.subr.bf16.mxu0 0
    %1546 = vmatpush1.bf16.msra.mxu0 0
    %1547 = vmatprep.subr.bf16.mxu0 0
    %1548 = vmatpush1.bf16.msra.mxu0 0
    %1549 = vmatprep.subr.bf16.mxu0 0
    %1550 = vmatpush1.bf16.msra.mxu0 0
    %1551 = vmatprep.subr.bf16.mxu0 0
    %1552 = vmatpush1.bf16.msra.mxu0 0
    %1553 = vmatprep.subr.bf16.mxu0 %v159
    %1554 = vmatpush1.bf16.msra.mxu0 %v156
    %1555 = vmatprep.subr.bf16.mxu0 0
    %1556 = vmatpush2.bf16.msra.mxu0 0
    %1557 = vmatprep.subr.bf16.mxu0 0
    %1558 = vmatpush2.bf16.msra.mxu0 0
    %1559 = vmatprep.subr.bf16.mxu0 0
    %1560 = vmatpush2.bf16.msra.mxu0 0
    %1561 = vmatprep.subr.bf16.mxu0 0
    %1562 = vmatpush2.bf16.msra.mxu0 0
    %1563 = vmatprep.subr.bf16.mxu0 0
    %1564 = vmatpush2.bf16.msra.mxu0 0
    %1565 = vmatprep.subr.bf16.mxu0 0
    %1566 = vmatpush2.bf16.msra.mxu0 0
    %1567 = vmatprep.subr.bf16.mxu0 0
    %1568 = vmatpush2.bf16.msra.mxu0 0
    %1569 = vmatprep.subr.bf16.mxu0 0
    %1570 = vmatpush2.bf16.msra.mxu0 0
    %1571 = vmatprep.mubr.bf16.mxu0 0
    %1572 = vmatmul.mubr.bf16.gmra.mxu0 %v1537
    %v1573 = vpop.f32.mrf.mxu0
    %v1574 = vadd.f32 %v91, %v1573
    %v1575 = vpop.f32.mrf.mxu0
    %v1576 = vadd.f32 %v95, %v1575
    %v1577 = vpop.f32.mrf.mxu0
    %v1578 = vpop.f32.mrf.mxu0
    %1579 = vdwg.mxu0
    %1580 = vmatprep.subr.bf16.mxu0 0
    %1581 = vmatpush1.bf16.msra.mxu0 0
    %1582 = vmatprep.subr.bf16.mxu0 0
    %1583 = vmatpush1.bf16.msra.mxu0 0
    %1584 = vmatprep.subr.bf16.mxu0 0
    %1585 = vmatpush1.bf16.msra.mxu0 0
    %1586 = vmatprep.subr.bf16.mxu0 0
    %1587 = vmatpush1.bf16.msra.mxu0 0
    %1588 = vmatprep.subr.bf16.mxu0 0
    %1589 = vmatpush1.bf16.msra.mxu0 0
    %1590 = vmatprep.subr.bf16.mxu0 0
    %1591 = vmatpush1.bf16.msra.mxu0 0
    %1592 = vmatprep.subr.bf16.mxu0 0
    %1593 = vmatpush1.bf16.msra.mxu0 0
    %1594 = vmatprep.subr.bf16.mxu0 0
    %1595 = vmatpush1.bf16.msra.mxu0 %v162
    %1596 = vmatprep.subr.bf16.mxu0 0
    %1597 = vmatpush2.bf16.msra.mxu0 0
    %1598 = vmatprep.subr.bf16.mxu0 0
    %1599 = vmatpush2.bf16.msra.mxu0 0
    %1600 = vmatprep.subr.bf16.mxu0 0
    %1601 = vmatpush2.bf16.msra.mxu0 0
    %1602 = vmatprep.subr.bf16.mxu0 0
    %1603 = vmatpush2.bf16.msra.mxu0 0
    %1604 = vmatprep.subr.bf16.mxu0 0
    %1605 = vmatpush2.bf16.msra.mxu0 0
    %1606 = vmatprep.subr.bf16.mxu0 0
    %1607 = vmatpush2.bf16.msra.mxu0 0
    %1608 = vmatprep.subr.bf16.mxu0 0
    %1609 = vmatpush2.bf16.msra.mxu0 0
    %1610 = vmatprep.subr.bf16.mxu0 0
    %1611 = vmatpush2.bf16.msra.mxu0 0
    %1612 = vmatprep.mubr.bf16.mxu0 0
    %1613 = vmatmul.mubr.bf16.gmra.mxu0 %v1537
    %v1614 = vpop.f32.mrf.mxu0
    %v1615 = vadd.f32 %v99, %v1614
    %v1616 = vpop.f32.mrf.mxu0
    %v1617 = vpop.f32.mrf.mxu0
    %v1618 = vpop.f32.mrf.mxu0
    %1619 = vdwg.mxu0
    %v1620 = vpack.c.bf16 %v1518, %v1518
    %1621 = vmatprep.subr.bf16.mxu0 %v348
    %1622 = vmatpush1.bf16.msra.mxu0 %v347
    %1623 = vmatprep.subr.bf16.mxu0 %v345
    %1624 = vmatpush1.bf16.msra.mxu0 %v344
    %1625 = vmatprep.subr.bf16.mxu0 %v342
    %1626 = vmatpush1.bf16.msra.mxu0 %v341
    %1627 = vmatprep.subr.bf16.mxu0 %v339
    %1628 = vmatpush1.bf16.msra.mxu0 %v338
    %1629 = vmatprep.subr.bf16.mxu0 %v336
    %1630 = vmatpush1.bf16.msra.mxu0 %v335
    %1631 = vmatprep.subr.bf16.mxu0 %v333
    %1632 = vmatpush1.bf16.msra.mxu0 %v332
    %1633 = vmatprep.subr.bf16.mxu0 %v330
    %1634 = vmatpush1.bf16.msra.mxu0 %v329
    %1635 = vmatprep.subr.bf16.mxu0 %v327
    %1636 = vmatpush1.bf16.msra.mxu0 %v326
    %1637 = vmatprep.subr.bf16.mxu0 0
    %1638 = vmatpush2.bf16.msra.mxu0 0
    %1639 = vmatprep.subr.bf16.mxu0 0
    %1640 = vmatpush2.bf16.msra.mxu0 0
    %1641 = vmatprep.subr.bf16.mxu0 0
    %1642 = vmatpush2.bf16.msra.mxu0 0
    %1643 = vmatprep.subr.bf16.mxu0 0
    %1644 = vmatpush2.bf16.msra.mxu0 0
    %1645 = vmatprep.subr.bf16.mxu0 0
    %1646 = vmatpush2.bf16.msra.mxu0 0
    %1647 = vmatprep.subr.bf16.mxu0 0
    %1648 = vmatpush2.bf16.msra.mxu0 0
    %1649 = vmatprep.subr.bf16.mxu0 0
    %1650 = vmatpush2.bf16.msra.mxu0 0
    %1651 = vmatprep.subr.bf16.mxu0 0
    %1652 = vmatpush2.bf16.msra.mxu0 0
    %1653 = vmatprep.mubr.bf16.mxu0 0
    %1654 = vmatmul.mubr.bf16.gmra.mxu0 %v1620
    %v1655 = vpop.f32.mrf.mxu0
    %v1656 = vadd.f32 0.0, %v1655
    %v1657 = vpop.f32.mrf.mxu0
    %v1658 = vadd.f32 0.0, %v1657
    %v1659 = vpop.f32.mrf.mxu0
    %v1660 = vpop.f32.mrf.mxu0
    %1661 = vdwg.mxu0
    %1662 = vmatprep.subr.bf16.mxu0 0
    %1663 = vmatpush1.bf16.msra.mxu0 %v349
    %1664 = vmatprep.subr.bf16.mxu0 0
    %1665 = vmatpush1.bf16.msra.mxu0 %v346
    %1666 = vmatprep.subr.bf16.mxu0 0
    %1667 = vmatpush1.bf16.msra.mxu0 %v343
    %1668 = vmatprep.subr.bf16.mxu0 0
    %1669 = vmatpush1.bf16.msra.mxu0 %v340
    %1670 = vmatprep.subr.bf16.mxu0 0
    %1671 = vmatpush1.bf16.msra.mxu0 %v337
    %1672 = vmatprep.subr.bf16.mxu0 0
    %1673 = vmatpush1.bf16.msra.mxu0 %v334
    %1674 = vmatprep.subr.bf16.mxu0 0
    %1675 = vmatpush1.bf16.msra.mxu0 %v331
    %1676 = vmatprep.subr.bf16.mxu0 0
    %1677 = vmatpush1.bf16.msra.mxu0 %v328
    %1678 = vmatprep.subr.bf16.mxu0 0
    %1679 = vmatpush2.bf16.msra.mxu0 0
    %1680 = vmatprep.subr.bf16.mxu0 0
    %1681 = vmatpush2.bf16.msra.mxu0 0
    %1682 = vmatprep.subr.bf16.mxu0 0
    %1683 = vmatpush2.bf16.msra.mxu0 0
    %1684 = vmatprep.subr.bf16.mxu0 0
    %1685 = vmatpush2.bf16.msra.mxu0 0
    %1686 = vmatprep.subr.bf16.mxu0 0
    %1687 = vmatpush2.bf16.msra.mxu0 0
    %1688 = vmatprep.subr.bf16.mxu0 0
    %1689 = vmatpush2.bf16.msra.mxu0 0
    %1690 = vmatprep.subr.bf16.mxu0 0
    %1691 = vmatpush2.bf16.msra.mxu0 0
    %1692 = vmatprep.subr.bf16.mxu0 0
    %1693 = vmatpush2.bf16.msra.mxu0 0
    %1694 = vmatprep.mubr.bf16.mxu0 0
    %1695 = vmatmul.mubr.bf16.gmra.mxu0 %v1620
    %v1696 = vpop.f32.mrf.mxu0
    %v1697 = vadd.f32 0.0, %v1696
    %v1698 = vpop.f32.mrf.mxu0
    %v1699 = vpop.f32.mrf.mxu0
    %v1700 = vpop.f32.mrf.mxu0
    %1701 = vdwg.mxu0
    %v1702 = vadd.f32 %v1574, %v1656
    %v1703 = vxor.u32 %v1702, 2147483648
    %v1704 = vmul.f32 %v1703, 1.442695
    %v1705 = vpow.pop %v1704
    %v1706 = vadd.f32 %v1705, 1.0
    %v1707 = vrcp.pop %v1706
    %v1708 = vmul.f32 1.0, %v1707
    %v1709 = vadd.f32 %v1576, %v1658
    %v1710 = vxor.u32 %v1709, 2147483648
    %v1711 = vmul.f32 %v1710, 1.442695
    %v1712 = vpow.pop %v1711
    %v1713 = vadd.f32 %v1712, 1.0
    %v1714 = vrcp.pop %v1713
    %v1715 = vmul.f32 1.0, %v1714
    %v1716 = vadd.f32 %v1697, %v108
    %v1717 = vmul.f32 %v1708, %v1716
    %v1718 = vadd.f32 %v1615, %v1717
    %v1719 = vtanh.pop %v1718
    %v1720 = vsub.f32 1.0, %v1715
    %v1721 = vmul.f32 %v1720, %v1719
    %v1722 = vmul.f32 %v1715, %v1518
    %v1723 = vadd.f32 %v1721, %v1722
    %v1724 = vmul.f32 %v1723, %v122
    %v1725 = vsel %vm151, %v1724, 0.0
    %1726 = vadd.xlane.f32.xlu0 %v1725
    %v1727 = vpop.xlane.xlu0 %1726
    %v1728 = vadd.f32 %v1727, %v115
    %v1732 = vrot.slane %v1728, 1
    %1733 = vrot.lane.b32.xlu0 %v1732, 4
    %v1734 = vpop.permute.xlu0 %1733
    %v1736 = vsel %vm136, %v50, %v1734
    %v1737 = vsel %vm136, %v128, %v1734
    %v1738 = vpack.c.bf16 %v1737, %v1736
    %v1740 = vshrl.u32 %v1738, 16
    %v1742 = vrot.slane %v1740, 3
    %v1743 = vshll.u32 %v1738, 16
    %v1745 = vrot.slane %v1743, 4
    %v1746 = vor.u32 %v1742, %v1745
    %v1748 = vsel %vm147, %v1746, 0
    %1750 = vmatprep.subr.bf16.mxu0 0
    %1751 = vmatpush1.bf16.msra.mxu0 0
    %1752 = vmatprep.subr.bf16.mxu0 0
    %1753 = vmatpush1.bf16.msra.mxu0 0
    %1754 = vmatprep.subr.bf16.mxu0 0
    %1755 = vmatpush1.bf16.msra.mxu0 0
    %1756 = vmatprep.subr.bf16.mxu0 0
    %1757 = vmatpush1.bf16.msra.mxu0 0
    %1758 = vmatprep.subr.bf16.mxu0 0
    %1759 = vmatpush1.bf16.msra.mxu0 0
    %1760 = vmatprep.subr.bf16.mxu0 0
    %1761 = vmatpush1.bf16.msra.mxu0 0
    %1762 = vmatprep.subr.bf16.mxu0 0
    %1763 = vmatpush1.bf16.msra.mxu0 0
    %1764 = vmatprep.subr.bf16.mxu0 %v159
    %1765 = vmatpush1.bf16.msra.mxu0 %v156
    %1766 = vmatprep.subr.bf16.mxu0 0
    %1767 = vmatpush2.bf16.msra.mxu0 0
    %1768 = vmatprep.subr.bf16.mxu0 0
    %1769 = vmatpush2.bf16.msra.mxu0 0
    %1770 = vmatprep.subr.bf16.mxu0 0
    %1771 = vmatpush2.bf16.msra.mxu0 0
    %1772 = vmatprep.subr.bf16.mxu0 0
    %1773 = vmatpush2.bf16.msra.mxu0 0
    %1774 = vmatprep.subr.bf16.mxu0 0
    %1775 = vmatpush2.bf16.msra.mxu0 0
    %1776 = vmatprep.subr.bf16.mxu0 0
    %1777 = vmatpush2.bf16.msra.mxu0 0
    %1778 = vmatprep.subr.bf16.mxu0 0
    %1779 = vmatpush2.bf16.msra.mxu0 0
    %1780 = vmatprep.subr.bf16.mxu0 0
    %1781 = vmatpush2.bf16.msra.mxu0 0
    %1782 = vmatprep.mubr.bf16.mxu0 0
    %1783 = vmatmul.mubr.bf16.gmra.mxu0 %v1748
    %v1784 = vpop.f32.mrf.mxu0
    %v1785 = vadd.f32 %v91, %v1784
    %v1786 = vpop.f32.mrf.mxu0
    %v1787 = vadd.f32 %v95, %v1786
    %v1788 = vpop.f32.mrf.mxu0
    %v1789 = vpop.f32.mrf.mxu0
    %1790 = vdwg.mxu0
    %1791 = vmatprep.subr.bf16.mxu0 0
    %1792 = vmatpush1.bf16.msra.mxu0 0
    %1793 = vmatprep.subr.bf16.mxu0 0
    %1794 = vmatpush1.bf16.msra.mxu0 0
    %1795 = vmatprep.subr.bf16.mxu0 0
    %1796 = vmatpush1.bf16.msra.mxu0 0
    %1797 = vmatprep.subr.bf16.mxu0 0
    %1798 = vmatpush1.bf16.msra.mxu0 0
    %1799 = vmatprep.subr.bf16.mxu0 0
    %1800 = vmatpush1.bf16.msra.mxu0 0
    %1801 = vmatprep.subr.bf16.mxu0 0
    %1802 = vmatpush1.bf16.msra.mxu0 0
    %1803 = vmatprep.subr.bf16.mxu0 0
    %1804 = vmatpush1.bf16.msra.mxu0 0
    %1805 = vmatprep.subr.bf16.mxu0 0
    %1806 = vmatpush1.bf16.msra.mxu0 %v162
    %1807 = vmatprep.subr.bf16.mxu0 0
    %1808 = vmatpush2.bf16.msra.mxu0 0
    %1809 = vmatprep.subr.bf16.mxu0 0
    %1810 = vmatpush2.bf16.msra.mxu0 0
    %1811 = vmatprep.subr.bf16.mxu0 0
    %1812 = vmatpush2.bf16.msra.mxu0 0
    %1813 = vmatprep.subr.bf16.mxu0 0
    %1814 = vmatpush2.bf16.msra.mxu0 0
    %1815 = vmatprep.subr.bf16.mxu0 0
    %1816 = vmatpush2.bf16.msra.mxu0 0
    %1817 = vmatprep.subr.bf16.mxu0 0
    %1818 = vmatpush2.bf16.msra.mxu0 0
    %1819 = vmatprep.subr.bf16.mxu0 0
    %1820 = vmatpush2.bf16.msra.mxu0 0
    %1821 = vmatprep.subr.bf16.mxu0 0
    %1822 = vmatpush2.bf16.msra.mxu0 0
    %1823 = vmatprep.mubr.bf16.mxu0 0
    %1824 = vmatmul.mubr.bf16.gmra.mxu0 %v1748
    %v1825 = vpop.f32.mrf.mxu0
    %v1826 = vadd.f32 %v99, %v1825
    %v1827 = vpop.f32.mrf.mxu0
    %v1828 = vpop.f32.mrf.mxu0
    %v1829 = vpop.f32.mrf.mxu0
    %1830 = vdwg.mxu0
    %v1831 = vpack.c.bf16 %v1723, %v1723
    %1832 = vmatprep.subr.bf16.mxu0 %v348
    %1833 = vmatpush1.bf16.msra.mxu0 %v347
    %1834 = vmatprep.subr.bf16.mxu0 %v345
    %1835 = vmatpush1.bf16.msra.mxu0 %v344
    %1836 = vmatprep.subr.bf16.mxu0 %v342
    %1837 = vmatpush1.bf16.msra.mxu0 %v341
    %1838 = vmatprep.subr.bf16.mxu0 %v339
    %1839 = vmatpush1.bf16.msra.mxu0 %v338
    %1840 = vmatprep.subr.bf16.mxu0 %v336
    %1841 = vmatpush1.bf16.msra.mxu0 %v335
    %1842 = vmatprep.subr.bf16.mxu0 %v333
    %1843 = vmatpush1.bf16.msra.mxu0 %v332
    %1844 = vmatprep.subr.bf16.mxu0 %v330
    %1845 = vmatpush1.bf16.msra.mxu0 %v329
    %1846 = vmatprep.subr.bf16.mxu0 %v327
    %1847 = vmatpush1.bf16.msra.mxu0 %v326
    %1848 = vmatprep.subr.bf16.mxu0 0
    %1849 = vmatpush2.bf16.msra.mxu0 0
    %1850 = vmatprep.subr.bf16.mxu0 0
    %1851 = vmatpush2.bf16.msra.mxu0 0
    %1852 = vmatprep.subr.bf16.mxu0 0
    %1853 = vmatpush2.bf16.msra.mxu0 0
    %1854 = vmatprep.subr.bf16.mxu0 0
    %1855 = vmatpush2.bf16.msra.mxu0 0
    %1856 = vmatprep.subr.bf16.mxu0 0
    %1857 = vmatpush2.bf16.msra.mxu0 0
    %1858 = vmatprep.subr.bf16.mxu0 0
    %1859 = vmatpush2.bf16.msra.mxu0 0
    %1860 = vmatprep.subr.bf16.mxu0 0
    %1861 = vmatpush2.bf16.msra.mxu0 0
    %1862 = vmatprep.subr.bf16.mxu0 0
    %1863 = vmatpush2.bf16.msra.mxu0 0
    %1864 = vmatprep.mubr.bf16.mxu0 0
    %1865 = vmatmul.mubr.bf16.gmra.mxu0 %v1831
    %v1866 = vpop.f32.mrf.mxu0
    %v1867 = vadd.f32 0.0, %v1866
    %v1868 = vpop.f32.mrf.mxu0
    %v1869 = vadd.f32 0.0, %v1868
    %v1870 = vpop.f32.mrf.mxu0
    %v1871 = vpop.f32.mrf.mxu0
    %1872 = vdwg.mxu0
    %1873 = vmatprep.subr.bf16.mxu0 0
    %1874 = vmatpush1.bf16.msra.mxu0 %v349
    %1875 = vmatprep.subr.bf16.mxu0 0
    %1876 = vmatpush1.bf16.msra.mxu0 %v346
    %1877 = vmatprep.subr.bf16.mxu0 0
    %1878 = vmatpush1.bf16.msra.mxu0 %v343
    %1879 = vmatprep.subr.bf16.mxu0 0
    %1880 = vmatpush1.bf16.msra.mxu0 %v340
    %1881 = vmatprep.subr.bf16.mxu0 0
    %1882 = vmatpush1.bf16.msra.mxu0 %v337
    %1883 = vmatprep.subr.bf16.mxu0 0
    %1884 = vmatpush1.bf16.msra.mxu0 %v334
    %1885 = vmatprep.subr.bf16.mxu0 0
    %1886 = vmatpush1.bf16.msra.mxu0 %v331
    %1887 = vmatprep.subr.bf16.mxu0 0
    %1888 = vmatpush1.bf16.msra.mxu0 %v328
    %1889 = vmatprep.subr.bf16.mxu0 0
    %1890 = vmatpush2.bf16.msra.mxu0 0
    %1891 = vmatprep.subr.bf16.mxu0 0
    %1892 = vmatpush2.bf16.msra.mxu0 0
    %1893 = vmatprep.subr.bf16.mxu0 0
    %1894 = vmatpush2.bf16.msra.mxu0 0
    %1895 = vmatprep.subr.bf16.mxu0 0
    %1896 = vmatpush2.bf16.msra.mxu0 0
    %1897 = vmatprep.subr.bf16.mxu0 0
    %1898 = vmatpush2.bf16.msra.mxu0 0
    %1899 = vmatprep.subr.bf16.mxu0 0
    %1900 = vmatpush2.bf16.msra.mxu0 0
    %1901 = vmatprep.subr.bf16.mxu0 0
    %1902 = vmatpush2.bf16.msra.mxu0 0
    %1903 = vmatprep.subr.bf16.mxu0 0
    %1904 = vmatpush2.bf16.msra.mxu0 0
    %1905 = vmatprep.mubr.bf16.mxu0 0
    %1906 = vmatmul.mubr.bf16.gmra.mxu0 %v1831
    %v1907 = vpop.f32.mrf.mxu0
    %v1908 = vadd.f32 0.0, %v1907
    %v1909 = vpop.f32.mrf.mxu0
    %v1910 = vpop.f32.mrf.mxu0
    %v1911 = vpop.f32.mrf.mxu0
    %1912 = vdwg.mxu0
    %v1913 = vadd.f32 %v1785, %v1867
    %v1914 = vxor.u32 %v1913, 2147483648
    %v1915 = vmul.f32 %v1914, 1.442695
    %v1916 = vpow.pop %v1915
    %v1917 = vadd.f32 %v1916, 1.0
    %v1918 = vrcp.pop %v1917
    %v1919 = vmul.f32 1.0, %v1918
    %v1920 = vadd.f32 %v1787, %v1869
    %v1921 = vxor.u32 %v1920, 2147483648
    %v1922 = vmul.f32 %v1921, 1.442695
    %v1923 = vpow.pop %v1922
    %v1924 = vadd.f32 %v1923, 1.0
    %v1925 = vrcp.pop %v1924
    %v1926 = vmul.f32 1.0, %v1925
    %v1927 = vadd.f32 %v1908, %v108
    %v1928 = vmul.f32 %v1919, %v1927
    %v1929 = vadd.f32 %v1826, %v1928
    %v1930 = vtanh.pop %v1929
    %v1931 = vsub.f32 1.0, %v1926
    %v1932 = vmul.f32 %v1931, %v1930
    %v1933 = vmul.f32 %v1926, %v1723
    %v1934 = vadd.f32 %v1932, %v1933
    %v1935 = vmul.f32 %v1934, %v122
    %v1936 = vsel %vm151, %v1935, 0.0
    %1937 = vadd.xlane.f32.xlu0 %v1936
    %v1938 = vpop.xlane.xlu0 %1937
    %v1939 = vadd.f32 %v1938, %v115
    %1940 = vrot.lane.b32.xlu0 %v691, 1
    %v1941 = vpop.permute.xlu0 %1940
    %1943 = vrot.lane.b32.xlu0 %v896, 2
    %v1944 = vpop.permute.xlu0 %1943
    %1946 = vrot.lane.b32.xlu0 %v1107, 3
    %v1947 = vpop.permute.xlu0 %1946
    %1949 = vrot.lane.b32.xlu0 %v1312, 4
    %v1950 = vpop.permute.xlu0 %1949
    %1952 = vrot.lane.b32.xlu0 %v1523, 5
    %v1953 = vpop.permute.xlu0 %1952
    %1955 = vrot.lane.b32.xlu0 %v1728, 6
    %v1956 = vpop.permute.xlu0 %1955
    %1959 = vrot.lane.b32.xlu0 %v1939, 7
    %v1960 = vpop.permute.xlu0 %1959
    %vm1962 = vcmask 7168
    %v1963 = vsel %vm1962, %v481, %v1941
    %vm1964 = vcmask 15360
    %v1965 = vsel %vm1964, %v1963, %v1944
    %vm1966 = vcmask 23552
    %v1967 = vsel %vm1966, %v1965, %v1947
    %v1968 = vsel %vm136, %v1967, %v1950
    %v1969 = vsel %vm147, %v1968, %v1953
    %vm1970 = vcmask 48128
    %v1971 = vsel %vm1970, %v1969, %v1956
    %vm1972 = vcmask 56320
    %v1973 = vsel %vm1972, %v1971, %v1960
    %vm1974 = vcmask 58368
    %1975 = vst.msk [vmem:[#allocation6] sm:$0x3] %vm1974, %v1973
    // Predicated region
    $region42: #{tpu_custom_call.1} parent=1 // pred_check
      _
    $region43: #{tpu_custom_call.1} parent=1 // pred_check_branch
      %1977 = sbr.rel (0) target = $region45
    $region44: #{tpu_custom_call.1} parent=1 // pred_region
      %s1979 = ssub.s32 32, 32
      %1980 = vsyncadd [#allocation5], %s1979
      %s1982 = sshll.u32 [#allocation6], 4
      %s1983 = int_to_ptr.vmem [resolvable:$true] %s1982
      %1985 = dma.vmem_to_hbm [thread:$0]  %s1983, 32, %s9, [#allocation5]
    $region45: #{tpu_custom_call.1} parent=1 // pred_fallthru
      _
    // Predicated region
    $region46: #{tpu_custom_call.1} parent=1 // pred_check
      _
    $region47: #{tpu_custom_call.1} parent=1 // pred_check_branch
      %1987 = sbr.rel (0) target = $region49
    $region48: #{tpu_custom_call.1} parent=1 // pred_region
      %1988 = dma.done [#allocation5], 32
    $region49: #{tpu_custom_call.1} parent=1 // pred_fallthru
      _
    %1989 = vsyncpa [#allocation4], 1
    %1990 = vsyncpa [#allocation5], 1

</llo_original>
